<compile_context>
chip_gen: v5e
topology: v5e:2x2
jax: 0.10.0
libtpu: 0.0.40
codegen_flags: <defaults>
</compile_context>

<pallas_src>
import math
import jax
import jax.numpy as jnp
from jax import lax
from jax.experimental import pallas as pl
from jax.experimental.pallas import tpu as pltpu


# ------------------------------ helpers ------------------------------------ #
def _round_up(x, m):
    return ((x + m - 1) // m) * m


def _cdiv(a, b):
    return -(-a // b)


def _vmem_capacity_bytes():
    try:
        cap = int(pltpu.get_tpu_info().vmem_capacity_bytes)
        if cap > 0:
            return cap
    except Exception:
        pass
    return 64 * 1024 * 1024          # conservative fallback (v7x per-core VMEM)


def _buf_bytes(shape, itemsize):
    """VMEM bytes of a buffer including (sublane, lane) tile padding."""
    sub = 8 * (4 // itemsize)        # 8 sublanes for f32, 16 for bf16
    s = [max(int(v), 1) for v in shape]
    s[-1] = _round_up(s[-1], 128)
    if len(s) >= 2:
        s[-2] = _round_up(s[-2], sub)
    n = 1
    for v in s:
        n *= v
    return n * itemsize


def _vmem_estimate(tb, D, ODf, TN):
    """Per-grid-step VMEM footprint (pipeline buffers + in-kernel temporaries)."""
    est = 0
    # Pipelined operand / output buffers (x2: Pallas double-buffers each,
    # including the constant-index-map weight blocks).
    est += 2 * _buf_bytes((2, tb, D), 2)       # streamed activations (bf16)
    est += 2 * _buf_bytes((tb, TN), 4)         # output score block (f32)
    est += 2 * _buf_bytes((2, D, ODf), 2)      # banded conv matrix (bf16)
    est += 2 * _buf_bytes((1, ODf), 4)         # conv bias row (f32)
    est += 2 * _buf_bytes((ODf, D), 2)         # fc weight (bf16)
    est += 2 * _buf_bytes((1, D), 4)           # fc bias row (f32)
    est += 2 * _buf_bytes((D, TN), 2)          # relation tile (bf16)
    est += _buf_bytes((tb, D), 2)              # cached y scratch (bf16)
    # In-kernel temporaries (conv matmul partials dominate).
    est += 2 * _buf_bytes((tb, ODf), 4)        # two f32 conv partial results
    est += _buf_bytes((tb, ODf), 2)            # bf16 copy of h
    est += 2 * (_buf_bytes((tb, D), 4) + _buf_bytes((tb, D), 2))   # tanh temps
    est += _buf_bytes((tb, D), 4)              # y (f32, pre-relu)
    est += _buf_bytes((tb, TN), 4)             # relation matmul result
    return est


def _pick_tiles(B, D, O, R2):
    """Pick (batch tile, relation tile, padded R2, vmem_limit) per generation."""
    ODf = O * D
    cap = _vmem_capacity_bytes()
    budget = max(24 * 1024 * 1024, cap // 2)   # headroom for compiler scratch

    # Relation tiling: one lane-dense tile when small, ~2K-wide tiles otherwise.
    r128 = _round_up(max(R2, 1), 128)
    if r128 <= 4096:
        TN, R2p = r128, r128
    else:
        nt = _cdiv(r128, 2048)
        TN = _round_up(_cdiv(R2, nt), 128)
        R2p = nt * TN

    B8 = _round_up(max(B, 1), 8)
    cands = [tb for tb in (512, 256, 128, 64, 32, 16) if tb <= B8]
    if not cands:
        cands = [B8]                           # tiny batch: one full-array block
    if cap < 100 * 1024 * 1024:
        # ~64 MiB part (v7x per-core): prefer >=2 batch tiles so the "parallel"
        # batch axis can shard across both TensorCores.
        multi = [tb for tb in cands if _cdiv(B8, tb) >= 2]
        cands = multi + [tb for tb in cands if tb not in multi]

    tb_sel = cands[-1]
    for tb in cands:
        if _vmem_estimate(tb, D, ODf, TN) <= budget:
            tb_sel = tb
            break

    vmem_limit = max(32 * 1024 * 1024, min(int(cap * 0.85), 100 * 1024 * 1024))
    return tb_sel, TN, R2p, vmem_limit


# ----------------------------- Pallas kernel ------------------------------- #
def _make_kernel():
    def kernel(x_ref, cm_ref, cbias_ref, fcw_ref, fcb_ref, relT_ref, o_ref, y_scr):
        f32 = jnp.float32

        # Compute the fc output once per batch tile (relation axis is the inner,
        # "arbitrary" grid axis; j==0 runs first for every batch tile).
        @pl.when(pl.program_id(1) == 0)
        def _():
            # tanh in f32 (EUP), then bf16 operands for the MXU.
            e0 = jnp.tanh(x_ref[0].astype(f32)).astype(jnp.bfloat16)    # (TB, D)
            e1 = jnp.tanh(x_ref[1].astype(f32)).astype(jnp.bfloat16)    # (TB, D)
            # Conv1d(2->O, k=3, same) + bn0/bn1 + channel-major flatten, all
            # encoded in the banded conv matrix -> two MXU matmuls, f32 acc.
            h = jnp.dot(e0, cm_ref[0], preferred_element_type=f32)
            h = h + jnp.dot(e1, cm_ref[1], preferred_element_type=f32)
            h = jnp.maximum(h + cbias_ref[...], 0.0).astype(jnp.bfloat16)  # (TB, O*D)
            # fc with bn2 folded.
            y = jnp.dot(h, fcw_ref[...], preferred_element_type=f32) + fcb_ref[...]
            y_scr[...] = jnp.maximum(y, 0.0).astype(jnp.bfloat16)          # (TB, D)

        # Relation scoring for this (batch tile, relation tile); lane-dense store.
        o_ref[...] = jnp.dot(y_scr[...], relT_ref[...], preferred_element_type=f32)

    return kernel


# ------------------------------ JAX wrapper -------------------------------- #
def convtransr_forward(embedding, emb_rel, triplets, params):
    """ConvTransR forward (eval-mode BN, dropout p=0)."""
    eps = 1e-5
    B = int(triplets.shape[0])
    D = int(embedding.shape[1])
    O = int(params["conv_w"].shape[0])
    R2 = int(emb_rel.shape[0])
    ODf = O * D

    TB, TN, R2p, vmem_limit = _pick_tiles(B, D, O, R2)
    B_pad = _round_up(max(B, 1), TB)

    # Gather both entity rows (data-dependent indexing stays in plain JAX);
    # stream in bf16 with the embedding axis unpadded, pad only the batch.
    idx = jnp.stack([triplets[:, 0], triplets[:, 2]], axis=0)            # (2, B)
    x = embedding[idx].astype(jnp.bfloat16)                              # (2, B, D)
    x = jnp.pad(x, ((0, 0), (0, B_pad - B), (0, 0)))                     # (2, Bp, D)

    # Fold eval-mode batchnorms into scale/shift:  y = x * s + t
    def bn_fold(gamma, beta, mean, var):
        s = gamma.astype(jnp.float32) / jnp.sqrt(var.astype(jnp.float32) + eps)
        return s, beta.astype(jnp.float32) - mean.astype(jnp.float32) * s

    s0, t0 = bn_fold(*params["bn0"])     # (2,)
    s1, t1 = bn_fold(*params["bn1"])     # (O,)
    s2, t2 = bn_fold(*params["bn2"])     # (D,)

    # Banded conv matrix: Conv1d(k=3, pad=1) with bn0 scale and bn1 scale folded
    # in, and the channel-major (o, d) flatten baked into the columns
    # (column index = o*D + d_out, matching torch's .view(B, -1)).
    Wf = params["conv_w"].astype(jnp.float32) * s1[:, None, None]        # (O, 2, 3)
    d_in = jnp.arange(D)[:, None]
    d_out = jnp.arange(D)[None, :]
    diff = d_in - d_out                                                  # (D, D)
    band = jnp.abs(diff) <= 1                                            # 3-tap band
    tap = jnp.clip(diff + 1, 0, 2)                                       # kernel index
    sel = jnp.where(band[None, None], Wf[:, :, tap], 0.0)                # (O,2,Din,Dout)
    cm = sel * s0[None, :, None, None]                                   # fold bn0 scale
    cm = jnp.transpose(cm, (1, 2, 0, 3)).reshape(2, D, ODf).astype(jnp.bfloat16)
    # Bias row: folded conv bias + bn1 shift + bn0 shift pushed through the
    # *valid* taps at each output position (exact zero-padding edge handling).
    tap_sum = sel.sum(axis=2)                                            # (O, 2, Dout)
    cbias = (params["conv_b"].astype(jnp.float32) * s1 + t1)[:, None] \
        + jnp.einsum("i,oid->od", t0, tap_sum)                           # (O, D)
    cbias = cbias.reshape(1, ODf)

    # fc weight/bias with bn2 folded; rows indexed o*D + d to match the flatten.
    fcw = params["fc_w"].astype(jnp.float32).reshape(D, O, D) * s2[:, None, None]
    fcw = jnp.transpose(fcw, (1, 2, 0)).reshape(ODf, D).astype(jnp.bfloat16)
    fcb = (params["fc_b"].astype(jnp.float32) * s2 + t2)[None, :]        # (1, D)

    # Relation matrix, transposed and zero-padded to a TN multiple (padded
    # score columns are garbage-free zeros and sliced off below).
    relT = jnp.pad(emb_rel.astype(jnp.float32).T, ((0, 0), (0, R2p - R2)))
    relT = relT.astype(jnp.bfloat16)                                     # (D, R2p)

    grid = (B_pad // TB, R2p // TN)
    out = pl.pallas_call(
        _make_kernel(),
        out_shape=jax.ShapeDtypeStruct((B_pad, R2p), jnp.float32),
        grid=grid,
        in_specs=[
            pl.BlockSpec((2, TB, D), lambda i, j: (0, i, 0)),    # streamed activations
            pl.BlockSpec((2, D, ODf), lambda i, j: (0, 0, 0)),   # banded conv matrix
            pl.BlockSpec((1, ODf), lambda i, j: (0, 0)),         # conv bias row
            pl.BlockSpec((ODf, D), lambda i, j: (0, 0)),         # fc weight
            pl.BlockSpec((1, D), lambda i, j: (0, 0)),           # fc bias row
            pl.BlockSpec((D, TN), lambda i, j: (0, j)),          # relation tile
        ],
        out_specs=pl.BlockSpec((TB, TN), lambda i, j: (i, j)),
        scratch_shapes=[pltpu.VMEM((TB, D), jnp.bfloat16)],      # cached fc output y
        compiler_params=pltpu.CompilerParams(
            dimension_semantics=("parallel", "arbitrary"),
            vmem_limit_bytes=vmem_limit,
        ),
    )(x, cm, cbias, fcw, fcb, relT)

    return out[:B, :R2]


# --------------------------- pure-JAX reference ----------------------------- #
def convtransr_reference(embedding, emb_rel, triplets, params):
    eps = 1e-5
    e_all = jnp.tanh(embedding.astype(jnp.float32))
    e1 = e_all[triplets[:, 0]][:, None, :]
    e2 = e_all[triplets[:, 2]][:, None, :]
    x = jnp.concatenate([e1, e2], axis=1)                # (B, 2, D)
    g0, b0, m0, v0 = params["bn0"]
    x = (x - m0[None, :, None]) / jnp.sqrt(v0 + eps)[None, :, None] \
        * g0[None, :, None] + b0[None, :, None]
    x = lax.conv_general_dilated(
        x, params["conv_w"].astype(jnp.float32),
        window_strides=(1,), padding=((1, 1),),
        dimension_numbers=("NCH", "OIH", "NCH"),
    ) + params["conv_b"][None, :, None]
    g1, b1, m1, v1 = params["bn1"]
    x = (x - m1[None, :, None]) / jnp.sqrt(v1 + eps)[None, :, None] \
        * g1[None, :, None] + b1[None, :, None]
    x = jnp.maximum(x, 0.0)
    B = x.shape[0]
    x = x.reshape(B, -1)                                 # (B, O*D) channel-major
    x = x @ params["fc_w"].T + params["fc_b"]
    g2, b2, m2, v2 = params["bn2"]
    x = (x - m2[None, :]) / jnp.sqrt(v2 + eps)[None, :] * g2[None, :] + b2[None, :]
    x = jnp.maximum(x, 0.0)
    return x @ emb_rel.T


# --------------------------------- main ------------------------------------ #
if __name__ == "__main__":
    key = jax.random.PRNGKey(0)
    num_entities = 16
    num_relations = 5          # -> scores over 2*num_relations = 10 relations
    D = 32                     # embedding_dim
    channels = 50              # module default
    ksize = 3
    B = 8                      # number of triplets

    ks = jax.random.split(key, 12)
    embedding = jax.random.normal(ks[0], (num_entities, D), jnp.float32)
    emb_rel = jax.random.normal(ks[1], (2 * num_relations, D), jnp.float32)
    heads = jax.random.randint(ks[2], (B,), 0, num_entities)
    rels = jax.random.randint(ks[3], (B,), 0, 2 * num_relations)
    tails = jax.random.randint(ks[4], (B,), 0, num_entities)
    triplets = jnp.stack([heads, rels, tails], axis=1).astype(jnp.int32)  # (B, 3)

    # deterministic parameter init (shapes per ConvTransR.__init__)
    fan_conv = 2 * ksize
    fan_fc = D * channels

    def bn_params(k, n):
        # non-trivial eval-mode BN statistics so the trace-time folding
        # (bn0 into the banded conv matrix, bn1/bn2 into weights) is exercised.
        k1, k2, k3, k4 = jax.random.split(k, 4)
        gamma = 1.0 + 0.2 * jax.random.normal(k1, (n,), jnp.float32)
        beta = 0.2 * jax.random.normal(k2, (n,), jnp.float32)
        mean = 0.2 * jax.random.normal(k3, (n,), jnp.float32)
        var = 0.5 + jax.random.uniform(k4, (n,), jnp.float32)
        return gamma, beta, mean, var

    params = {
        "conv_w": jax.random.uniform(ks[5], (channels, 2, ksize), jnp.float32,
                                     -1.0 / math.sqrt(fan_conv), 1.0 / math.sqrt(fan_conv)),
        "conv_b": jax.random.uniform(ks[6], (channels,), jnp.float32,
                                     -1.0 / math.sqrt(fan_conv), 1.0 / math.sqrt(fan_conv)),
        "fc_w": jax.random.uniform(ks[7], (D, D * channels), jnp.float32,
                                   -1.0 / math.sqrt(fan_fc), 1.0 / math.sqrt(fan_fc)),
        "fc_b": jax.random.uniform(ks[8], (D,), jnp.float32,
                                   -1.0 / math.sqrt(fan_fc), 1.0 / math.sqrt(fan_fc)),
        "bn0": bn_params(ks[9], 2),
        "bn1": bn_params(ks[10], channels),
        "bn2": bn_params(ks[11], D),
    }

    out = convtransr_forward(embedding, emb_rel, triplets, params)
    out = jax.block_until_ready(out)

    ref = convtransr_reference(embedding, emb_rel, triplets, params)
    assert out.shape == (B, 2 * num_relations), out.shape
    # Tolerance: activations are streamed in bf16 and all three matmuls
    # (conv-as-matmul, fc, relation scoring) run on the MXU in bf16 with
    # f32 accumulation; the reference is pure f32.
    err = float(jnp.max(jnp.abs(out - ref)))
    assert jnp.allclose(out, ref, rtol=3e-2, atol=3e-2), f"max abs err {err}"

    print("KERNEL_OK")
</pallas_src>

<mosaic_0001>
module attributes {stable_mosaic.version = 11 : i64} {
  func.func @kernel(%arg0: i32, %arg1: i32, %arg2: memref<2x8x32xbf16, #tpu.memory_space<vmem>>, %arg3: memref<2x32x1600xbf16, #tpu.memory_space<vmem>>, %arg4: memref<1x1600xf32, #tpu.memory_space<vmem>>, %arg5: memref<1600x32xbf16, #tpu.memory_space<vmem>>, %arg6: memref<1x32xf32, #tpu.memory_space<vmem>>, %arg7: memref<32x128xbf16, #tpu.memory_space<vmem>>, %arg8: memref<8x128xf32, #tpu.memory_space<vmem>>, %arg9: memref<8x32xbf16, #tpu.memory_space<vmem>>) attributes {dimension_semantics = [#tpu.dimension_semantics<parallel>, #tpu.dimension_semantics<arbitrary>], iteration_bounds = array<i64: 1, 1>, scalar_prefetch = 0 : i64, scratch_operands = 1 : i64, tpu.core_type = #tpu.core_type<tc>, window_params = [{transform_indices = @transform_0, window_bounds = array<i64: 2, 8, 32>}, {pipeline_mode = #tpu.pipeline_mode<synchronous>, transform_indices = @transform_1, window_bounds = array<i64: 2, 32, 1600>}, {pipeline_mode = #tpu.pipeline_mode<synchronous>, transform_indices = @transform_2, window_bounds = array<i64: 1, 1600>}, {pipeline_mode = #tpu.pipeline_mode<synchronous>, transform_indices = @transform_3, window_bounds = array<i64: 1600, 32>}, {pipeline_mode = #tpu.pipeline_mode<synchronous>, transform_indices = @transform_4, window_bounds = array<i64: 1, 32>}, {transform_indices = @transform_5, window_bounds = array<i64: 32, 128>}, {transform_indices = @transform_6, window_bounds = array<i64: 8, 128>}]} {
    %c0_i32 = arith.constant 0 : i32
    %0 = arith.cmpi eq, %arg1, %c0_i32 : i32
    %1 = arith.extui %0 : i1 to i32
    %c0_i32_0 = arith.constant 0 : i32
    %2 = arith.cmpi ne, %1, %c0_i32_0 : i32
    scf.if %2 {
      %c0_6 = arith.constant 0 : index
      %c0_7 = arith.constant 0 : index
      %c0_8 = arith.constant 0 : index
      %7 = vector.load %arg2[%c0_6, %c0_7, %c0_8] : memref<2x8x32xbf16, #tpu.memory_space<vmem>>, vector<1x8x32xbf16>
      %8 = vector.shape_cast %7 : vector<1x8x32xbf16> to vector<8x32xbf16>
      %9 = arith.extf %8 : vector<8x32xbf16> to vector<8x32xf32>
      %10 = math.tanh %9 : vector<8x32xf32>
      %11 = arith.truncf %10 : vector<8x32xf32> to vector<8x32xbf16>
      %c1 = arith.constant 1 : index
      %c0_9 = arith.constant 0 : index
      %c0_10 = arith.constant 0 : index
      %12 = vector.load %arg2[%c1, %c0_9, %c0_10] : memref<2x8x32xbf16, #tpu.memory_space<vmem>>, vector<1x8x32xbf16>
      %13 = vector.shape_cast %12 : vector<1x8x32xbf16> to vector<8x32xbf16>
      %14 = arith.extf %13 : vector<8x32xbf16> to vector<8x32xf32>
      %15 = math.tanh %14 : vector<8x32xf32>
      %16 = arith.truncf %15 : vector<8x32xf32> to vector<8x32xbf16>
      %c0_11 = arith.constant 0 : index
      %c0_12 = arith.constant 0 : index
      %c0_13 = arith.constant 0 : index
      %17 = vector.load %arg3[%c0_11, %c0_12, %c0_13] : memref<2x32x1600xbf16, #tpu.memory_space<vmem>>, vector<1x32x1600xbf16>
      %18 = vector.shape_cast %17 : vector<1x32x1600xbf16> to vector<32x1600xbf16>
      %cst_14 = arith.constant dense<0.000000e+00> : vector<8x1600xf32>
      %19 = tpu.matmul %11, %18, %cst_14 {dimension_numbers = #tpu.dot_dimension_numbers<[1], [0], [0], [1], [0, 0, 1, 1], [], []>} : vector<8x32xbf16>, vector<32x1600xbf16>, vector<8x1600xf32> -> vector<8x1600xf32>
      %c1_15 = arith.constant 1 : index
      %c0_16 = arith.constant 0 : index
      %c0_17 = arith.constant 0 : index
      %20 = vector.load %arg3[%c1_15, %c0_16, %c0_17] : memref<2x32x1600xbf16, #tpu.memory_space<vmem>>, vector<1x32x1600xbf16>
      %21 = vector.shape_cast %20 : vector<1x32x1600xbf16> to vector<32x1600xbf16>
      %cst_18 = arith.constant dense<0.000000e+00> : vector<8x1600xf32>
      %22 = tpu.matmul %16, %21, %cst_18 {dimension_numbers = #tpu.dot_dimension_numbers<[1], [0], [0], [1], [0, 0, 1, 1], [], []>} : vector<8x32xbf16>, vector<32x1600xbf16>, vector<8x1600xf32> -> vector<8x1600xf32>
      %23 = arith.addf %19, %22 : vector<8x1600xf32>
      %c0_19 = arith.constant 0 : index
      %c0_20 = arith.constant 0 : index
      %24 = vector.load %arg4[%c0_19, %c0_20] : memref<1x1600xf32, #tpu.memory_space<vmem>>, vector<1x1600xf32>
      %25 = vector.broadcast %24 : vector<1x1600xf32> to vector<8x1600xf32>
      %26 = arith.addf %23, %25 : vector<8x1600xf32>
      %cst_21 = arith.constant 0.000000e+00 : f32
      %27 = vector.broadcast %cst_21 : f32 to vector<8x1600xf32>
      %28 = arith.maximumf %26, %27 : vector<8x1600xf32>
      %29 = arith.truncf %28 : vector<8x1600xf32> to vector<8x1600xbf16>
      %c0_22 = arith.constant 0 : index
      %c0_23 = arith.constant 0 : index
      %30 = vector.load %arg5[%c0_22, %c0_23] : memref<1600x32xbf16, #tpu.memory_space<vmem>>, vector<1600x32xbf16>
      %cst_24 = arith.constant dense<0.000000e+00> : vector<8x32xf32>
      %31 = tpu.matmul %29, %30, %cst_24 {dimension_numbers = #tpu.dot_dimension_numbers<[1], [0], [0], [1], [0, 0, 1, 1], [], []>} : vector<8x1600xbf16>, vector<1600x32xbf16>, vector<8x32xf32> -> vector<8x32xf32>
      %c0_25 = arith.constant 0 : index
      %c0_26 = arith.constant 0 : index
      %32 = vector.load %arg6[%c0_25, %c0_26] : memref<1x32xf32, #tpu.memory_space<vmem>>, vector<1x32xf32>
      %33 = vector.broadcast %32 : vector<1x32xf32> to vector<8x32xf32>
      %34 = arith.addf %31, %33 : vector<8x32xf32>
      %cst_27 = arith.constant 0.000000e+00 : f32
      %35 = vector.broadcast %cst_27 : f32 to vector<8x32xf32>
      %36 = arith.maximumf %34, %35 : vector<8x32xf32>
      %37 = arith.truncf %36 : vector<8x32xf32> to vector<8x32xbf16>
      %c0_28 = arith.constant 0 : index
      %c0_29 = arith.constant 0 : index
      %38 = vector.load %arg9[%c0_28, %c0_29] : memref<8x32xbf16, #tpu.memory_space<vmem>>, vector<8x32xbf16>
      tpu.vector_store %arg9[%c0_28, %c0_29], %37 {strides = array<i32>} : memref<8x32xbf16, #tpu.memory_space<vmem>>, vector<8x32xbf16>,
    } else {
    }
    %c0 = arith.constant 0 : index
    %c0_1 = arith.constant 0 : index
    %3 = vector.load %arg9[%c0, %c0_1] : memref<8x32xbf16, #tpu.memory_space<vmem>>, vector<8x32xbf16>
    %c0_2 = arith.constant 0 : index
    %c0_3 = arith.constant 0 : index
    %4 = vector.load %arg7[%c0_2, %c0_3] : memref<32x128xbf16, #tpu.memory_space<vmem>>, vector<32x128xbf16>
    %cst = arith.constant dense<0.000000e+00> : vector<8x128xf32>
    %5 = tpu.matmul %3, %4, %cst {dimension_numbers = #tpu.dot_dimension_numbers<[1], [0], [0], [1], [0, 0, 1, 1], [], []>} : vector<8x32xbf16>, vector<32x128xbf16>, vector<8x128xf32> -> vector<8x128xf32>
    %c0_4 = arith.constant 0 : index
    %c0_5 = arith.constant 0 : index
    %6 = vector.load %arg8[%c0_4, %c0_5] : memref<8x128xf32, #tpu.memory_space<vmem>>, vector<8x128xf32>
    tpu.vector_store %arg8[%c0_4, %c0_5], %5 {strides = array<i32>} : memref<8x128xf32, #tpu.memory_space<vmem>>, vector<8x128xf32>,
    return
  }
  func.func @transform_0(%arg0: i32, %arg1: i32) -> (i32, i32, i32) {
    %c0_i32 = arith.constant 0 : i32
    %c0_i32_0 = arith.constant 0 : i32
    %c0_i32_1 = arith.constant 0 : i32
    return %c0_i32, %arg0, %c0_i32_0 : i32, i32, i32
  }
  func.func @transform_1(%arg0: i32, %arg1: i32) -> (i32, i32, i32) {
    %c0_i32 = arith.constant 0 : i32
    %c0_i32_0 = arith.constant 0 : i32
    %c0_i32_1 = arith.constant 0 : i32
    %c0_i32_2 = arith.constant 0 : i32
    return %c0_i32, %c0_i32_0, %c0_i32_1 : i32, i32, i32
  }
  func.func @transform_2(%arg0: i32, %arg1: i32) -> (i32, i32) {
    %c0_i32 = arith.constant 0 : i32
    %c0_i32_0 = arith.constant 0 : i32
    %c0_i32_1 = arith.constant 0 : i32
    return %c0_i32, %c0_i32_0 : i32, i32
  }
  func.func @transform_3(%arg0: i32, %arg1: i32) -> (i32, i32) {
    %c0_i32 = arith.constant 0 : i32
    %c0_i32_0 = arith.constant 0 : i32
    %c0_i32_1 = arith.constant 0 : i32
    return %c0_i32, %c0_i32_0 : i32, i32
  }
  func.func @transform_4(%arg0: i32, %arg1: i32) -> (i32, i32) {
    %c0_i32 = arith.constant 0 : i32
    %c0_i32_0 = arith.constant 0 : i32
    %c0_i32_1 = arith.constant 0 : i32
    return %c0_i32, %c0_i32_0 : i32, i32
  }
  func.func @transform_5(%arg0: i32, %arg1: i32) -> (i32, i32) {
    %c0_i32 = arith.constant 0 : i32
    %c0_i32_0 = arith.constant 0 : i32
    return %c0_i32, %arg1 : i32, i32
  }
  func.func @transform_6(%arg0: i32, %arg1: i32) -> (i32, i32) {
    %c0_i32 = arith.constant 0 : i32
    return %arg0, %arg1 : i32, i32
  }
}

</mosaic_0001>

<llo_original>
// kernel: tpu_custom_call.1
$region0: #{tpu_custom_call.1}
  #allocation0 [shape = 'u32[]', space=smem, size = 0x4, offset = 0x4, fixed_abs, tag = 'smem constant byte address 0x4 - core index']
  #allocation1 [shape = 'u32[72,128]{1,0:T(1,128)}', space=vmem, size = 0x9000, scoped, tag = 'internal scratch']
  #allocation2 [shape = 'bf16[8,32]{1,0:T(8,128)(2,1)}', space=vmem, size = 0x800, scoped, tag = 'scratch operand']
  %s0 = inlined_call_operand.vmem [shape: bf16[2,8,32], index: 0, kind: input, shape index: {}]
  %s1 = inlined_call_operand.vmem [shape: bf16[2,32,1600], index: 1, kind: input, shape index: {}]
  %s2 = inlined_call_operand.vmem [shape: f32[1,1600], index: 2, kind: input, shape index: {}]
  %s3 = inlined_call_operand.vmem [shape: bf16[1600,32], index: 3, kind: input, shape index: {}]
  %s4 = inlined_call_operand.vmem [shape: f32[1,32], index: 4, kind: input, shape index: {}]
  %s5 = inlined_call_operand.vmem [shape: bf16[32,128], index: 5, kind: input, shape index: {}]
  %s6 = inlined_call_operand.hbm [shape: f32[8,128], index: 6, kind: output, shape index: {}]
  %s7 = sld [smem:[#allocation0]]
  $region38: #{tpu_custom_call.1} parent=0
    _
  %s9 = ssub.s32 1, %s7
  %s10 = scalar_select 0, %s9, %s7
  $region1: #{tpu_custom_call.1} parent=0
    #allocation3 [shape = 'u8[4096]{0}', space=vmem, size = 0x1000, scoped, tag = 'output window, operand 0, single buffered']
    #allocation4 [shape = 's32[1]{0}', space=sflag, size = 0x4, scoped, tag = 'scoped memory for tpu_custom_call.1']
    %11 = vsyncpa [#allocation4], 0
    // Predicated region
    $region2: #{tpu_custom_call.1} parent=1 // pred_check
      _
    $region3: #{tpu_custom_call.1} parent=1 // pred_check_branch
      %13 = sbr.rel (0) target = $region5
    $region4: #{tpu_custom_call.1} parent=1 // pred_region
      _
    $region5: #{tpu_custom_call.1} parent=1 // pred_fallthru
      _
    // Predicated region
    $region6: #{tpu_custom_call.1} parent=1 // pred_check
      _
    $region7: #{tpu_custom_call.1} parent=1 // pred_check_branch
      %15 = sbr.rel (0) target = $region9
    $region8: #{tpu_custom_call.1} parent=1 // pred_region
      _
    $region9: #{tpu_custom_call.1} parent=1 // pred_fallthru
      _
    // Predicated region
    $region10: #{tpu_custom_call.1} parent=1 // pred_check
      _
    $region11: #{tpu_custom_call.1} parent=1 // pred_check_branch
      %17 = sbr.rel (0) target = $region13
    $region12: #{tpu_custom_call.1} parent=1 // pred_region
      _
    $region13: #{tpu_custom_call.1} parent=1 // pred_fallthru
      _
    // Predicated region
    $region14: #{tpu_custom_call.1} parent=1 // pred_check
      _
    $region15: #{tpu_custom_call.1} parent=1 // pred_check_branch
      %19 = sbr.rel (0) target = $region17
    $region16: #{tpu_custom_call.1} parent=1 // pred_region
      _
    $region17: #{tpu_custom_call.1} parent=1 // pred_fallthru
      _
    // Predicated region
    $region18: #{tpu_custom_call.1} parent=1 // pred_check
      _
    $region19: #{tpu_custom_call.1} parent=1 // pred_check_branch
      %21 = sbr.rel (0) target = $region21
    $region20: #{tpu_custom_call.1} parent=1 // pred_region
      _
    $region21: #{tpu_custom_call.1} parent=1 // pred_fallthru
      _
    // Predicated region
    $region22: #{tpu_custom_call.1} parent=1 // pred_check
      _
    $region23: #{tpu_custom_call.1} parent=1 // pred_check_branch
      %23 = sbr.rel (0) target = $region25
    $region24: #{tpu_custom_call.1} parent=1 // pred_region
      _
    $region25: #{tpu_custom_call.1} parent=1 // pred_fallthru
      _
    %p25 = scmp.eq.s32.totalorder 0, 0
    // Predicated region
    $region26: #{tpu_custom_call.1} parent=1 // pred_check
      %p26 = pneg %p25
    $region27: #{tpu_custom_call.1} parent=1 // pred_check_branch
      %28 = sbr.rel (%p26) target = $region29
    $region28: #{tpu_custom_call.1} parent=1 // pred_region
      %v29 = vld [vmem:[%s0] sm:$0xf]
      %v30 = vunpack.c.l.bf16 %v29
      %v31 = vtanh.pop %v30
      %v32 = vpack.c.bf16 %v31, %v31
      %s33 = scalar_lea.vmem %s0, 4
      %v34 = vld [vmem:[%s33] sm:$0xf]
      %v35 = vunpack.c.l.bf16 %v34
      %v36 = vtanh.pop %v35
      %v37 = vpack.c.bf16 %v36, %v36
      %v38 = vld [vmem:[%s1] sm:$0xff]
      %v39 = vld [vmem:[%s1 + $0x8] sm:$0xff]
      %v40 = vld [vmem:[%s1 + $0x10] sm:$0xff]
      %v41 = vld [vmem:[%s1 + $0x18] sm:$0xff]
      %v42 = vld [vmem:[%s1 + $0x20] sm:$0xff]
      %v43 = vld [vmem:[%s1 + $0x28] sm:$0xff]
      %v44 = vld [vmem:[%s1 + $0x30] sm:$0xf]
      %v45 = vld [vmem:[%s1 + $0x34] sm:$0xff]
      %v46 = vld [vmem:[%s1 + $0x3c] sm:$0xff]
      %v47 = vld [vmem:[%s1 + $0x44] sm:$0xff]
      %v48 = vld [vmem:[%s1 + $0x4c] sm:$0xff]
      %v49 = vld [vmem:[%s1 + $0x54] sm:$0xff]
      %v50 = vld [vmem:[%s1 + $0x5c] sm:$0xff]
      %v51 = vld [vmem:[%s1 + $0x64] sm:$0xf]
      %v52 = vld [vmem:[%s1 + $0x68] sm:$0xff]
      %v53 = vld [vmem:[%s1 + $0x70] sm:$0xff]
      %v54 = vld [vmem:[%s1 + $0x78] sm:$0xff]
      %v55 = vld [vmem:[%s1 + $0x80] sm:$0xff]
      %v56 = vld [vmem:[%s1 + $0x88] sm:$0xff]
      %v57 = vld [vmem:[%s1 + $0x90] sm:$0xff]
      %v58 = vld [vmem:[%s1 + $0x98] sm:$0xf]
      %v59 = vld [vmem:[%s1 + $0x9c] sm:$0xff]
      %v60 = vld [vmem:[%s1 + $0xa4] sm:$0xff]
      %v61 = vld [vmem:[%s1 + $0xac] sm:$0xff]
      %v62 = vld [vmem:[%s1 + $0xb4] sm:$0xff]
      %v63 = vld [vmem:[%s1 + $0xbc] sm:$0xff]
      %v64 = vld [vmem:[%s1 + $0xc4] sm:$0xff]
      %v65 = vld [vmem:[%s1 + $0xcc] sm:$0xf]
      %s66 = scalar_lea.vmem %s1, 208
      %v67 = vld [vmem:[%s66] sm:$0xff]
      %v68 = vld [vmem:[%s66 + $0x8] sm:$0xff]
      %v69 = vld [vmem:[%s66 + $0x10] sm:$0xff]
      %v70 = vld [vmem:[%s66 + $0x18] sm:$0xff]
      %v71 = vld [vmem:[%s66 + $0x20] sm:$0xff]
      %v72 = vld [vmem:[%s66 + $0x28] sm:$0xff]
      %v73 = vld [vmem:[%s66 + $0x30] sm:$0xf]
      %v74 = vld [vmem:[%s66 + $0x34] sm:$0xff]
      %v75 = vld [vmem:[%s66 + $0x3c] sm:$0xff]
      %v76 = vld [vmem:[%s66 + $0x44] sm:$0xff]
      %v77 = vld [vmem:[%s66 + $0x4c] sm:$0xff]
      %v78 = vld [vmem:[%s66 + $0x54] sm:$0xff]
      %v79 = vld [vmem:[%s66 + $0x5c] sm:$0xff]
      %v80 = vld [vmem:[%s66 + $0x64] sm:$0xf]
      %v81 = vld [vmem:[%s66 + $0x68] sm:$0xff]
      %v82 = vld [vmem:[%s66 + $0x70] sm:$0xff]
      %v83 = vld [vmem:[%s66 + $0x78] sm:$0xff]
      %v84 = vld [vmem:[%s66 + $0x80] sm:$0xff]
      %v85 = vld [vmem:[%s66 + $0x88] sm:$0xff]
      %v86 = vld [vmem:[%s66 + $0x90] sm:$0xff]
      %v87 = vld [vmem:[%s66 + $0x98] sm:$0xf]
      %v88 = vld [vmem:[%s66 + $0x9c] sm:$0xff]
      %v89 = vld [vmem:[%s66 + $0xa4] sm:$0xff]
      %v90 = vld [vmem:[%s66 + $0xac] sm:$0xff]
      %v91 = vld [vmem:[%s66 + $0xb4] sm:$0xff]
      %v92 = vld [vmem:[%s66 + $0xbc] sm:$0xff]
      %v93 = vld [vmem:[%s66 + $0xc4] sm:$0xff]
      %v94 = vld [vmem:[%s66 + $0xcc] sm:$0xf]
      %v123 = vunpack.c.l.b16 %v67
      %v124 = vunpack.c.h.b16 %v67
      %v125 = vunpack.c.l.b16 %v68
      %v126 = vunpack.c.h.b16 %v68
      %v127 = vunpack.c.l.b16 %v69
      %v128 = vunpack.c.h.b16 %v69
      %v129 = vunpack.c.l.b16 %v70
      %v130 = vunpack.c.h.b16 %v70
      %v131 = vunpack.c.l.b16 %v71
      %v132 = vunpack.c.h.b16 %v71
      %v133 = vunpack.c.l.b16 %v72
      %v134 = vunpack.c.h.b16 %v72
      %v135 = vunpack.c.l.b16 %v73
      %v136 = vunpack.c.l.b16 %v74
      %v137 = vunpack.c.h.b16 %v74
      %v138 = vunpack.c.l.b16 %v75
      %v139 = vunpack.c.h.b16 %v75
      %v140 = vunpack.c.l.b16 %v76
      %v141 = vunpack.c.h.b16 %v76
      %v142 = vunpack.c.l.b16 %v77
      %v143 = vunpack.c.h.b16 %v77
      %v144 = vunpack.c.l.b16 %v78
      %v145 = vunpack.c.h.b16 %v78
      %v146 = vunpack.c.l.b16 %v79
      %v147 = vunpack.c.h.b16 %v79
      %v148 = vunpack.c.l.b16 %v80
      %v149 = vunpack.c.l.b16 %v81
      %v150 = vunpack.c.h.b16 %v81
      %v151 = vunpack.c.l.b16 %v82
      %v152 = vunpack.c.h.b16 %v82
      %v153 = vunpack.c.l.b16 %v83
      %v154 = vunpack.c.h.b16 %v83
      %v155 = vunpack.c.l.b16 %v84
      %v156 = vunpack.c.h.b16 %v84
      %v157 = vunpack.c.l.b16 %v85
      %v158 = vunpack.c.h.b16 %v85
      %v159 = vunpack.c.l.b16 %v86
      %v160 = vunpack.c.h.b16 %v86
      %v161 = vunpack.c.l.b16 %v87
      %v162 = vunpack.c.l.b16 %v88
      %v163 = vunpack.c.h.b16 %v88
      %v164 = vunpack.c.l.b16 %v89
      %v165 = vunpack.c.h.b16 %v89
      %v166 = vunpack.c.l.b16 %v90
      %v167 = vunpack.c.h.b16 %v90
      %v168 = vunpack.c.l.b16 %v91
      %v169 = vunpack.c.h.b16 %v91
      %v170 = vunpack.c.l.b16 %v92
      %v171 = vunpack.c.h.b16 %v92
      %v172 = vunpack.c.l.b16 %v93
      %v173 = vunpack.c.h.b16 %v93
      %v174 = vunpack.c.l.b16 %v94
      %v175 = vpack.c.b16 %v136, %v123
      %v176 = vpack.c.b16 %v137, %v124
      %v177 = vpack.c.b16 %v138, %v125
      %v178 = vpack.c.b16 %v139, %v126
      %v179 = vpack.c.b16 %v140, %v127
      %v180 = vpack.c.b16 %v141, %v128
      %v181 = vpack.c.b16 %v142, %v129
      %v182 = vpack.c.b16 %v143, %v130
      %v183 = vpack.c.b16 %v144, %v131
      %v184 = vpack.c.b16 %v145, %v132
      %v185 = vpack.c.b16 %v146, %v133
      %v186 = vpack.c.b16 %v147, %v134
      %v187 = vpack.c.b16 %v148, %v135
      %v188 = vpack.c.b16 %v162, %v149
      %v189 = vpack.c.b16 %v163, %v150
      %v190 = vpack.c.b16 %v164, %v151
      %v191 = vpack.c.b16 %v165, %v152
      %v192 = vpack.c.b16 %v166, %v153
      %v193 = vpack.c.b16 %v167, %v154
      %v194 = vpack.c.b16 %v168, %v155
      %v195 = vpack.c.b16 %v169, %v156
      %v196 = vpack.c.b16 %v170, %v157
      %v197 = vpack.c.b16 %v171, %v158
      %v198 = vpack.c.b16 %v172, %v159
      %v199 = vpack.c.b16 %v173, %v160
      %v200 = vpack.c.b16 %v174, %v161
      %vm227 = vcmask 261120
      %v229 = vsel %vm227, %v37, 0
      %231 = vmatpush.bf16.msra.mxu0 0
      %232 = vmatpush.bf16.msra.mxu0 0
      %233 = vmatpush.bf16.msra.mxu0 0
      %234 = vmatpush.bf16.msra.mxu0 0
      %235 = vmatpush.bf16.msra.mxu0 0
      %236 = vmatpush.bf16.msra.mxu0 0
      %237 = vmatpush.bf16.msra.mxu0 %v188
      %238 = vmatpush.bf16.msra.mxu0 %v175
      %239 = vmatmul.bf16.gmra.mxu0 %v229
      %v240 = vpop.f32.mrf.mxu0
      %v241 = vadd.f32 0.0, %v240
      %v242 = vpop.f32.mrf.mxu0
      %243 = vdwg.mxu0
      %244 = vmatpush.bf16.msra.mxu0 0
      %245 = vmatpush.bf16.msra.mxu0 0
      %246 = vmatpush.bf16.msra.mxu0 0
      %247 = vmatpush.bf16.msra.mxu0 0
      %248 = vmatpush.bf16.msra.mxu0 0
      %249 = vmatpush.bf16.msra.mxu0 0
      %250 = vmatpush.bf16.msra.mxu0 %v189
      %251 = vmatpush.bf16.msra.mxu0 %v176
      %252 = vmatmul.bf16.gmra.mxu0 %v229
      %v253 = vpop.f32.mrf.mxu0
      %v254 = vadd.f32 0.0, %v253
      %v255 = vpop.f32.mrf.mxu0
      %256 = vdwg.mxu0
      %257 = vmatpush.bf16.msra.mxu0 0
      %258 = vmatpush.bf16.msra.mxu0 0
      %259 = vmatpush.bf16.msra.mxu0 0
      %260 = vmatpush.bf16.msra.mxu0 0
      %261 = vmatpush.bf16.msra.mxu0 0
      %262 = vmatpush.bf16.msra.mxu0 0
      %263 = vmatpush.bf16.msra.mxu0 %v190
      %264 = vmatpush.bf16.msra.mxu0 %v177
      %265 = vmatmul.bf16.gmra.mxu0 %v229
      %v266 = vpop.f32.mrf.mxu0
      %v267 = vadd.f32 0.0, %v266
      %v268 = vpop.f32.mrf.mxu0
      %269 = vdwg.mxu0
      %270 = vmatpush.bf16.msra.mxu0 0
      %271 = vmatpush.bf16.msra.mxu0 0
      %272 = vmatpush.bf16.msra.mxu0 0
      %273 = vmatpush.bf16.msra.mxu0 0
      %274 = vmatpush.bf16.msra.mxu0 0
      %275 = vmatpush.bf16.msra.mxu0 0
      %276 = vmatpush.bf16.msra.mxu0 %v191
      %277 = vmatpush.bf16.msra.mxu0 %v178
      %278 = vmatmul.bf16.gmra.mxu0 %v229
      %v279 = vpop.f32.mrf.mxu0
      %v280 = vadd.f32 0.0, %v279
      %v281 = vpop.f32.mrf.mxu0
      %282 = vdwg.mxu0
      %283 = vmatpush.bf16.msra.mxu0 0
      %284 = vmatpush.bf16.msra.mxu0 0
      %285 = vmatpush.bf16.msra.mxu0 0
      %286 = vmatpush.bf16.msra.mxu0 0
      %287 = vmatpush.bf16.msra.mxu0 0
      %288 = vmatpush.bf16.msra.mxu0 0
      %289 = vmatpush.bf16.msra.mxu0 %v192
      %290 = vmatpush.bf16.msra.mxu0 %v179
      %291 = vmatmul.bf16.gmra.mxu0 %v229
      %v292 = vpop.f32.mrf.mxu0
      %v293 = vadd.f32 0.0, %v292
      %v294 = vpop.f32.mrf.mxu0
      %295 = vdwg.mxu0
      %296 = vmatpush.bf16.msra.mxu0 0
      %297 = vmatpush.bf16.msra.mxu0 0
      %298 = vmatpush.bf16.msra.mxu0 0
      %299 = vmatpush.bf16.msra.mxu0 0
      %300 = vmatpush.bf16.msra.mxu0 0
      %301 = vmatpush.bf16.msra.mxu0 0
      %302 = vmatpush.bf16.msra.mxu0 %v193
      %303 = vmatpush.bf16.msra.mxu0 %v180
      %304 = vmatmul.bf16.gmra.mxu0 %v229
      %v305 = vpop.f32.mrf.mxu0
      %v306 = vadd.f32 0.0, %v305
      %v307 = vpop.f32.mrf.mxu0
      %308 = vdwg.mxu0
      %309 = vmatpush.bf16.msra.mxu0 0
      %310 = vmatpush.bf16.msra.mxu0 0
      %311 = vmatpush.bf16.msra.mxu0 0
      %312 = vmatpush.bf16.msra.mxu0 0
      %313 = vmatpush.bf16.msra.mxu0 0
      %314 = vmatpush.bf16.msra.mxu0 0
      %315 = vmatpush.bf16.msra.mxu0 %v194
      %316 = vmatpush.bf16.msra.mxu0 %v181
      %317 = vmatmul.bf16.gmra.mxu0 %v229
      %v318 = vpop.f32.mrf.mxu0
      %v319 = vadd.f32 0.0, %v318
      %v320 = vpop.f32.mrf.mxu0
      %321 = vdwg.mxu0
      %322 = vmatpush.bf16.msra.mxu0 0
      %323 = vmatpush.bf16.msra.mxu0 0
      %324 = vmatpush.bf16.msra.mxu0 0
      %325 = vmatpush.bf16.msra.mxu0 0
      %326 = vmatpush.bf16.msra.mxu0 0
      %327 = vmatpush.bf16.msra.mxu0 0
      %328 = vmatpush.bf16.msra.mxu0 %v195
      %329 = vmatpush.bf16.msra.mxu0 %v182
      %330 = vmatmul.bf16.gmra.mxu0 %v229
      %v331 = vpop.f32.mrf.mxu0
      %v332 = vadd.f32 0.0, %v331
      %v333 = vpop.f32.mrf.mxu0
      %334 = vdwg.mxu0
      %335 = vmatpush.bf16.msra.mxu0 0
      %336 = vmatpush.bf16.msra.mxu0 0
      %337 = vmatpush.bf16.msra.mxu0 0
      %338 = vmatpush.bf16.msra.mxu0 0
      %339 = vmatpush.bf16.msra.mxu0 0
      %340 = vmatpush.bf16.msra.mxu0 0
      %341 = vmatpush.bf16.msra.mxu0 %v196
      %342 = vmatpush.bf16.msra.mxu0 %v183
      %343 = vmatmul.bf16.gmra.mxu0 %v229
      %v344 = vpop.f32.mrf.mxu0
      %v345 = vadd.f32 0.0, %v344
      %v346 = vpop.f32.mrf.mxu0
      %347 = vdwg.mxu0
      %348 = vmatpush.bf16.msra.mxu0 0
      %349 = vmatpush.bf16.msra.mxu0 0
      %350 = vmatpush.bf16.msra.mxu0 0
      %351 = vmatpush.bf16.msra.mxu0 0
      %352 = vmatpush.bf16.msra.mxu0 0
      %353 = vmatpush.bf16.msra.mxu0 0
      %354 = vmatpush.bf16.msra.mxu0 %v197
      %355 = vmatpush.bf16.msra.mxu0 %v184
      %356 = vmatmul.bf16.gmra.mxu0 %v229
      %v357 = vpop.f32.mrf.mxu0
      %v358 = vadd.f32 0.0, %v357
      %v359 = vpop.f32.mrf.mxu0
      %360 = vdwg.mxu0
      %361 = vmatpush.bf16.msra.mxu0 0
      %362 = vmatpush.bf16.msra.mxu0 0
      %363 = vmatpush.bf16.msra.mxu0 0
      %364 = vmatpush.bf16.msra.mxu0 0
      %365 = vmatpush.bf16.msra.mxu0 0
      %366 = vmatpush.bf16.msra.mxu0 0
      %367 = vmatpush.bf16.msra.mxu0 %v198
      %368 = vmatpush.bf16.msra.mxu0 %v185
      %369 = vmatmul.bf16.gmra.mxu0 %v229
      %v370 = vpop.f32.mrf.mxu0
      %v371 = vadd.f32 0.0, %v370
      %v372 = vpop.f32.mrf.mxu0
      %373 = vdwg.mxu0
      %374 = vmatpush.bf16.msra.mxu0 0
      %375 = vmatpush.bf16.msra.mxu0 0
      %376 = vmatpush.bf16.msra.mxu0 0
      %377 = vmatpush.bf16.msra.mxu0 0
      %378 = vmatpush.bf16.msra.mxu0 0
      %379 = vmatpush.bf16.msra.mxu0 0
      %380 = vmatpush.bf16.msra.mxu0 %v199
      %381 = vmatpush.bf16.msra.mxu0 %v186
      %382 = vmatmul.bf16.gmra.mxu0 %v229
      %v383 = vpop.f32.mrf.mxu0
      %v384 = vadd.f32 0.0, %v383
      %v385 = vpop.f32.mrf.mxu0
      %386 = vdwg.mxu0
      %387 = vmatpush.bf16.msra.mxu0 0
      %388 = vmatpush.bf16.msra.mxu0 0
      %389 = vmatpush.bf16.msra.mxu0 0
      %390 = vmatpush.bf16.msra.mxu0 0
      %391 = vmatpush.bf16.msra.mxu0 0
      %392 = vmatpush.bf16.msra.mxu0 0
      %393 = vmatpush.bf16.msra.mxu0 %v200
      %394 = vmatpush.bf16.msra.mxu0 %v187
      %395 = vmatmul.bf16.gmra.mxu0 %v229
      %v396 = vpop.f32.mrf.mxu0
      %v397 = vadd.f32 0.0, %v396
      %v398 = vpop.f32.mrf.mxu0
      %399 = vdwg.mxu0
      %v428 = vunpack.c.l.b16 %v38
      %v429 = vunpack.c.h.b16 %v38
      %v430 = vunpack.c.l.b16 %v39
      %v431 = vunpack.c.h.b16 %v39
      %v432 = vunpack.c.l.b16 %v40
      %v433 = vunpack.c.h.b16 %v40
      %v434 = vunpack.c.l.b16 %v41
      %v435 = vunpack.c.h.b16 %v41
      %v436 = vunpack.c.l.b16 %v42
      %v437 = vunpack.c.h.b16 %v42
      %v438 = vunpack.c.l.b16 %v43
      %v439 = vunpack.c.h.b16 %v43
      %v440 = vunpack.c.l.b16 %v44
      %v441 = vunpack.c.l.b16 %v45
      %v442 = vunpack.c.h.b16 %v45
      %v443 = vunpack.c.l.b16 %v46
      %v444 = vunpack.c.h.b16 %v46
      %v445 = vunpack.c.l.b16 %v47
      %v446 = vunpack.c.h.b16 %v47
      %v447 = vunpack.c.l.b16 %v48
      %v448 = vunpack.c.h.b16 %v48
      %v449 = vunpack.c.l.b16 %v49
      %v450 = vunpack.c.h.b16 %v49
      %v451 = vunpack.c.l.b16 %v50
      %v452 = vunpack.c.h.b16 %v50
      %v453 = vunpack.c.l.b16 %v51
      %v454 = vunpack.c.l.b16 %v52
      %v455 = vunpack.c.h.b16 %v52
      %v456 = vunpack.c.l.b16 %v53
      %v457 = vunpack.c.h.b16 %v53
      %v458 = vunpack.c.l.b16 %v54
      %v459 = vunpack.c.h.b16 %v54
      %v460 = vunpack.c.l.b16 %v55
      %v461 = vunpack.c.h.b16 %v55
      %v462 = vunpack.c.l.b16 %v56
      %v463 = vunpack.c.h.b16 %v56
      %v464 = vunpack.c.l.b16 %v57
      %v465 = vunpack.c.h.b16 %v57
      %v466 = vunpack.c.l.b16 %v58
      %v467 = vunpack.c.l.b16 %v59
      %v468 = vunpack.c.h.b16 %v59
      %v469 = vunpack.c.l.b16 %v60
      %v470 = vunpack.c.h.b16 %v60
      %v471 = vunpack.c.l.b16 %v61
      %v472 = vunpack.c.h.b16 %v61
      %v473 = vunpack.c.l.b16 %v62
      %v474 = vunpack.c.h.b16 %v62
      %v475 = vunpack.c.l.b16 %v63
      %v476 = vunpack.c.h.b16 %v63
      %v477 = vunpack.c.l.b16 %v64
      %v478 = vunpack.c.h.b16 %v64
      %v479 = vunpack.c.l.b16 %v65
      %v480 = vpack.c.b16 %v441, %v428
      %v481 = vpack.c.b16 %v442, %v429
      %v482 = vpack.c.b16 %v443, %v430
      %v483 = vpack.c.b16 %v444, %v431
      %v484 = vpack.c.b16 %v445, %v432
      %v485 = vpack.c.b16 %v446, %v433
      %v486 = vpack.c.b16 %v447, %v434
      %v487 = vpack.c.b16 %v448, %v435
      %v488 = vpack.c.b16 %v449, %v436
      %v489 = vpack.c.b16 %v450, %v437
      %v490 = vpack.c.b16 %v451, %v438
      %v491 = vpack.c.b16 %v452, %v439
      %v492 = vpack.c.b16 %v453, %v440
      %v493 = vpack.c.b16 %v467, %v454
      %v494 = vpack.c.b16 %v468, %v455
      %v495 = vpack.c.b16 %v469, %v456
      %v496 = vpack.c.b16 %v470, %v457
      %v497 = vpack.c.b16 %v471, %v458
      %v498 = vpack.c.b16 %v472, %v459
      %v499 = vpack.c.b16 %v473, %v460
      %v500 = vpack.c.b16 %v474, %v461
      %v501 = vpack.c.b16 %v475, %v462
      %v502 = vpack.c.b16 %v476, %v463
      %v503 = vpack.c.b16 %v477, %v464
      %v504 = vpack.c.b16 %v478, %v465
      %v505 = vpack.c.b16 %v479, %v466
      %v533 = vsel %vm227, %v32, 0
      %535 = vmatpush.bf16.msra.mxu0 0
      %536 = vmatpush.bf16.msra.mxu0 0
      %537 = vmatpush.bf16.msra.mxu0 0
      %538 = vmatpush.bf16.msra.mxu0 0
      %539 = vmatpush.bf16.msra.mxu0 0
      %540 = vmatpush.bf16.msra.mxu0 0
      %541 = vmatpush.bf16.msra.mxu0 %v493
      %542 = vmatpush.bf16.msra.mxu0 %v480
      %543 = vmatmul.bf16.gmra.mxu0 %v533
      %v544 = vpop.f32.mrf.mxu0
      %v545 = vadd.f32 %v241, %v544
      %v546 = vpop.f32.mrf.mxu0
      %547 = vdwg.mxu0
      %548 = vmatpush.bf16.msra.mxu0 0
      %549 = vmatpush.bf16.msra.mxu0 0
      %550 = vmatpush.bf16.msra.mxu0 0
      %551 = vmatpush.bf16.msra.mxu0 0
      %552 = vmatpush.bf16.msra.mxu0 0
      %553 = vmatpush.bf16.msra.mxu0 0
      %554 = vmatpush.bf16.msra.mxu0 %v494
      %555 = vmatpush.bf16.msra.mxu0 %v481
      %556 = vmatmul.bf16.gmra.mxu0 %v533
      %v557 = vpop.f32.mrf.mxu0
      %v558 = vadd.f32 %v254, %v557
      %v559 = vpop.f32.mrf.mxu0
      %560 = vdwg.mxu0
      %561 = vmatpush.bf16.msra.mxu0 0
      %562 = vmatpush.bf16.msra.mxu0 0
      %563 = vmatpush.bf16.msra.mxu0 0
      %564 = vmatpush.bf16.msra.mxu0 0
      %565 = vmatpush.bf16.msra.mxu0 0
      %566 = vmatpush.bf16.msra.mxu0 0
      %567 = vmatpush.bf16.msra.mxu0 %v495
      %568 = vmatpush.bf16.msra.mxu0 %v482
      %569 = vmatmul.bf16.gmra.mxu0 %v533
      %v570 = vpop.f32.mrf.mxu0
      %v571 = vadd.f32 %v267, %v570
      %v572 = vpop.f32.mrf.mxu0
      %573 = vdwg.mxu0
      %574 = vmatpush.bf16.msra.mxu0 0
      %575 = vmatpush.bf16.msra.mxu0 0
      %576 = vmatpush.bf16.msra.mxu0 0
      %577 = vmatpush.bf16.msra.mxu0 0
      %578 = vmatpush.bf16.msra.mxu0 0
      %579 = vmatpush.bf16.msra.mxu0 0
      %580 = vmatpush.bf16.msra.mxu0 %v496
      %581 = vmatpush.bf16.msra.mxu0 %v483
      %582 = vmatmul.bf16.gmra.mxu0 %v533
      %v583 = vpop.f32.mrf.mxu0
      %v584 = vadd.f32 %v280, %v583
      %v585 = vpop.f32.mrf.mxu0
      %586 = vdwg.mxu0
      %587 = vmatpush.bf16.msra.mxu0 0
      %588 = vmatpush.bf16.msra.mxu0 0
      %589 = vmatpush.bf16.msra.mxu0 0
      %590 = vmatpush.bf16.msra.mxu0 0
      %591 = vmatpush.bf16.msra.mxu0 0
      %592 = vmatpush.bf16.msra.mxu0 0
      %593 = vmatpush.bf16.msra.mxu0 %v497
      %594 = vmatpush.bf16.msra.mxu0 %v484
      %595 = vmatmul.bf16.gmra.mxu0 %v533
      %v596 = vpop.f32.mrf.mxu0
      %v597 = vadd.f32 %v293, %v596
      %v598 = vpop.f32.mrf.mxu0
      %599 = vdwg.mxu0
      %600 = vmatpush.bf16.msra.mxu0 0
      %601 = vmatpush.bf16.msra.mxu0 0
      %602 = vmatpush.bf16.msra.mxu0 0
      %603 = vmatpush.bf16.msra.mxu0 0
      %604 = vmatpush.bf16.msra.mxu0 0
      %605 = vmatpush.bf16.msra.mxu0 0
      %606 = vmatpush.bf16.msra.mxu0 %v498
      %607 = vmatpush.bf16.msra.mxu0 %v485
      %608 = vmatmul.bf16.gmra.mxu0 %v533
      %v609 = vpop.f32.mrf.mxu0
      %v610 = vadd.f32 %v306, %v609
      %v611 = vpop.f32.mrf.mxu0
      %612 = vdwg.mxu0
      %613 = vmatpush.bf16.msra.mxu0 0
      %614 = vmatpush.bf16.msra.mxu0 0
      %615 = vmatpush.bf16.msra.mxu0 0
      %616 = vmatpush.bf16.msra.mxu0 0
      %617 = vmatpush.bf16.msra.mxu0 0
      %618 = vmatpush.bf16.msra.mxu0 0
      %619 = vmatpush.bf16.msra.mxu0 %v499
      %620 = vmatpush.bf16.msra.mxu0 %v486
      %621 = vmatmul.bf16.gmra.mxu0 %v533
      %v622 = vpop.f32.mrf.mxu0
      %v623 = vadd.f32 %v319, %v622
      %v624 = vpop.f32.mrf.mxu0
      %625 = vdwg.mxu0
      %626 = vmatpush.bf16.msra.mxu0 0
      %627 = vmatpush.bf16.msra.mxu0 0
      %628 = vmatpush.bf16.msra.mxu0 0
      %629 = vmatpush.bf16.msra.mxu0 0
      %630 = vmatpush.bf16.msra.mxu0 0
      %631 = vmatpush.bf16.msra.mxu0 0
      %632 = vmatpush.bf16.msra.mxu0 %v500
      %633 = vmatpush.bf16.msra.mxu0 %v487
      %634 = vmatmul.bf16.gmra.mxu0 %v533
      %v635 = vpop.f32.mrf.mxu0
      %v636 = vadd.f32 %v332, %v635
      %v637 = vpop.f32.mrf.mxu0
      %638 = vdwg.mxu0
      %639 = vmatpush.bf16.msra.mxu0 0
      %640 = vmatpush.bf16.msra.mxu0 0
      %641 = vmatpush.bf16.msra.mxu0 0
      %642 = vmatpush.bf16.msra.mxu0 0
      %643 = vmatpush.bf16.msra.mxu0 0
      %644 = vmatpush.bf16.msra.mxu0 0
      %645 = vmatpush.bf16.msra.mxu0 %v501
      %646 = vmatpush.bf16.msra.mxu0 %v488
      %647 = vmatmul.bf16.gmra.mxu0 %v533
      %v648 = vpop.f32.mrf.mxu0
      %v649 = vadd.f32 %v345, %v648
      %v650 = vpop.f32.mrf.mxu0
      %651 = vdwg.mxu0
      %652 = vmatpush.bf16.msra.mxu0 0
      %653 = vmatpush.bf16.msra.mxu0 0
      %654 = vmatpush.bf16.msra.mxu0 0
      %655 = vmatpush.bf16.msra.mxu0 0
      %656 = vmatpush.bf16.msra.mxu0 0
      %657 = vmatpush.bf16.msra.mxu0 0
      %658 = vmatpush.bf16.msra.mxu0 %v502
      %659 = vmatpush.bf16.msra.mxu0 %v489
      %660 = vmatmul.bf16.gmra.mxu0 %v533
      %v661 = vpop.f32.mrf.mxu0
      %v662 = vadd.f32 %v358, %v661
      %v663 = vpop.f32.mrf.mxu0
      %664 = vdwg.mxu0
      %665 = vmatpush.bf16.msra.mxu0 0
      %666 = vmatpush.bf16.msra.mxu0 0
      %667 = vmatpush.bf16.msra.mxu0 0
      %668 = vmatpush.bf16.msra.mxu0 0
      %669 = vmatpush.bf16.msra.mxu0 0
      %670 = vmatpush.bf16.msra.mxu0 0
      %671 = vmatpush.bf16.msra.mxu0 %v503
      %672 = vmatpush.bf16.msra.mxu0 %v490
      %673 = vmatmul.bf16.gmra.mxu0 %v533
      %v674 = vpop.f32.mrf.mxu0
      %v675 = vadd.f32 %v371, %v674
      %v676 = vpop.f32.mrf.mxu0
      %677 = vdwg.mxu0
      %678 = vmatpush.bf16.msra.mxu0 0
      %679 = vmatpush.bf16.msra.mxu0 0
      %680 = vmatpush.bf16.msra.mxu0 0
      %681 = vmatpush.bf16.msra.mxu0 0
      %682 = vmatpush.bf16.msra.mxu0 0
      %683 = vmatpush.bf16.msra.mxu0 0
      %684 = vmatpush.bf16.msra.mxu0 %v504
      %685 = vmatpush.bf16.msra.mxu0 %v491
      %686 = vmatmul.bf16.gmra.mxu0 %v533
      %v687 = vpop.f32.mrf.mxu0
      %v688 = vadd.f32 %v384, %v687
      %v689 = vpop.f32.mrf.mxu0
      %690 = vdwg.mxu0
      %691 = vmatpush.bf16.msra.mxu0 0
      %692 = vmatpush.bf16.msra.mxu0 0
      %693 = vmatpush.bf16.msra.mxu0 0
      %694 = vmatpush.bf16.msra.mxu0 0
      %695 = vmatpush.bf16.msra.mxu0 0
      %696 = vmatpush.bf16.msra.mxu0 0
      %697 = vmatpush.bf16.msra.mxu0 %v505
      %698 = vmatpush.bf16.msra.mxu0 %v492
      %699 = vmatmul.bf16.gmra.mxu0 %v533
      %v700 = vpop.f32.mrf.mxu0
      %v701 = vadd.f32 %v397, %v700
      %v702 = vpop.f32.mrf.mxu0
      %703 = vdwg.mxu0
      %v704 = vld [vmem:[%s2] sm:$0xff]
      %v705 = vld [vmem:[%s2 + $0x8] sm:$0x1f]
      %v708 = vperm.slane %v704, 0
      %v709 = vperm.slane %v704, 1
      %v710 = vperm.slane %v704, 2
      %v711 = vperm.slane %v704, 3
      %v712 = vperm.slane %v704, 4
      %v713 = vperm.slane %v704, 5
      %v714 = vperm.slane %v704, 6
      %v715 = vperm.slane %v704, 7
      %v716 = vperm.slane %v705, 0
      %v717 = vperm.slane %v705, 1
      %v718 = vperm.slane %v705, 2
      %v719 = vperm.slane %v705, 3
      %v720 = vperm.slane %v705, 4
      %v734 = vadd.f32 %v545, %v708
      %v735 = vadd.f32 %v558, %v709
      %v736 = vadd.f32 %v571, %v710
      %v737 = vadd.f32 %v584, %v711
      %v738 = vadd.f32 %v597, %v712
      %v739 = vadd.f32 %v610, %v713
      %v740 = vadd.f32 %v623, %v714
      %v741 = vadd.f32 %v636, %v715
      %v742 = vadd.f32 %v649, %v716
      %v743 = vadd.f32 %v662, %v717
      %v744 = vadd.f32 %v675, %v718
      %v745 = vadd.f32 %v688, %v719
      %v746 = vadd.f32 %v701, %v720
      %v747 = vmax.f32 %v734, 0.0
      %v748 = vmax.f32 %v735, 0.0
      %v749 = vmax.f32 %v736, 0.0
      %v750 = vmax.f32 %v737, 0.0
      %v751 = vmax.f32 %v738, 0.0
      %v752 = vmax.f32 %v739, 0.0
      %v753 = vmax.f32 %v740, 0.0
      %v754 = vmax.f32 %v741, 0.0
      %v755 = vmax.f32 %v742, 0.0
      %v756 = vmax.f32 %v743, 0.0
      %v757 = vmax.f32 %v744, 0.0
      %v758 = vmax.f32 %v745, 0.0
      %v759 = vmax.f32 %v746, 0.0
      %v760 = vpack.c.bf16 %v747, %v747
      %v761 = vpack.c.bf16 %v748, %v748
      %v762 = vpack.c.bf16 %v749, %v749
      %v763 = vpack.c.bf16 %v750, %v750
      %v764 = vpack.c.bf16 %v751, %v751
      %v765 = vpack.c.bf16 %v752, %v752
      %v766 = vpack.c.bf16 %v753, %v753
      %v767 = vpack.c.bf16 %v754, %v754
      %v768 = vpack.c.bf16 %v755, %v755
      %v769 = vpack.c.bf16 %v756, %v756
      %v770 = vpack.c.bf16 %v757, %v757
      %v771 = vpack.c.bf16 %v758, %v758
      %v772 = vpack.c.bf16 %v759, %v759
      %v773 = vld [vmem:[%s3] sm:$0xf]
      %v774 = vld [vmem:[%s3 + $0x4] sm:$0xf]
      %v775 = vld [vmem:[%s3 + $0x8] sm:$0xf]
      %v776 = vld [vmem:[%s3 + $0xc] sm:$0xf]
      %v777 = vld [vmem:[%s3 + $0x10] sm:$0xf]
      %v778 = vld [vmem:[%s3 + $0x14] sm:$0xf]
      %v779 = vld [vmem:[%s3 + $0x18] sm:$0xf]
      %v780 = vld [vmem:[%s3 + $0x1c] sm:$0xf]
      %v781 = vld [vmem:[%s3 + $0x20] sm:$0xf]
      %v782 = vld [vmem:[%s3 + $0x24] sm:$0xf]
      %v783 = vld [vmem:[%s3 + $0x28] sm:$0xf]
      %v784 = vld [vmem:[%s3 + $0x2c] sm:$0xf]
      %v785 = vld [vmem:[%s3 + $0x30] sm:$0xf]
      %v786 = vld [vmem:[%s3 + $0x34] sm:$0xf]
      %v787 = vld [vmem:[%s3 + $0x38] sm:$0xf]
      %v788 = vld [vmem:[%s3 + $0x3c] sm:$0xf]
      %v789 = vld [vmem:[%s3 + $0x40] sm:$0xf]
      %v790 = vld [vmem:[%s3 + $0x44] sm:$0xf]
      %v791 = vld [vmem:[%s3 + $0x48] sm:$0xf]
      %v792 = vld [vmem:[%s3 + $0x4c] sm:$0xf]
      %v793 = vld [vmem:[%s3 + $0x50] sm:$0xf]
      %v794 = vld [vmem:[%s3 + $0x54] sm:$0xf]
      %v795 = vld [vmem:[%s3 + $0x58] sm:$0xf]
      %v796 = vld [vmem:[%s3 + $0x5c] sm:$0xf]
      %v797 = vld [vmem:[%s3 + $0x60] sm:$0xf]
      %v798 = vld [vmem:[%s3 + $0x64] sm:$0xf]
      %v799 = vld [vmem:[%s3 + $0x68] sm:$0xf]
      %v800 = vld [vmem:[%s3 + $0x6c] sm:$0xf]
      %v801 = vld [vmem:[%s3 + $0x70] sm:$0xf]
      %v802 = vld [vmem:[%s3 + $0x74] sm:$0xf]
      %v803 = vld [vmem:[%s3 + $0x78] sm:$0xf]
      %v804 = vld [vmem:[%s3 + $0x7c] sm:$0xf]
      %v805 = vld [vmem:[%s3 + $0x80] sm:$0xf]
      %v806 = vld [vmem:[%s3 + $0x84] sm:$0xf]
      %v807 = vld [vmem:[%s3 + $0x88] sm:$0xf]
      %v808 = vld [vmem:[%s3 + $0x8c] sm:$0xf]
      %v809 = vld [vmem:[%s3 + $0x90] sm:$0xf]
      %v810 = vld [vmem:[%s3 + $0x94] sm:$0xf]
      %v811 = vld [vmem:[%s3 + $0x98] sm:$0xf]
      %v812 = vld [vmem:[%s3 + $0x9c] sm:$0xf]
      %v813 = vld [vmem:[%s3 + $0xa0] sm:$0xf]
      %v814 = vld [vmem:[%s3 + $0xa4] sm:$0xf]
      %v815 = vld [vmem:[%s3 + $0xa8] sm:$0xf]
      %v816 = vld [vmem:[%s3 + $0xac] sm:$0xf]
      %v817 = vld [vmem:[%s3 + $0xb0] sm:$0xf]
      %v818 = vld [vmem:[%s3 + $0xb4] sm:$0xf]
      %v819 = vld [vmem:[%s3 + $0xb8] sm:$0xf]
      %v820 = vld [vmem:[%s3 + $0xbc] sm:$0xf]
      %v821 = vld [vmem:[%s3 + $0xc0] sm:$0xf]
      %v822 = vld [vmem:[%s3 + $0xc4] sm:$0xf]
      %v823 = vld [vmem:[%s3 + $0xc8] sm:$0xf]
      %v824 = vld [vmem:[%s3 + $0xcc] sm:$0xf]
      %v825 = vld [vmem:[%s3 + $0xd0] sm:$0xf]
      %v826 = vld [vmem:[%s3 + $0xd4] sm:$0xf]
      %v827 = vld [vmem:[%s3 + $0xd8] sm:$0xf]
      %v828 = vld [vmem:[%s3 + $0xdc] sm:$0xf]
      %v829 = vld [vmem:[%s3 + $0xe0] sm:$0xf]
      %v830 = vld [vmem:[%s3 + $0xe4] sm:$0xf]
      %v831 = vld [vmem:[%s3 + $0xe8] sm:$0xf]
      %v832 = vld [vmem:[%s3 + $0xec] sm:$0xf]
      %v833 = vld [vmem:[%s3 + $0xf0] sm:$0xf]
      %v834 = vld [vmem:[%s3 + $0xf4] sm:$0xf]
      %v835 = vld [vmem:[%s3 + $0xf8] sm:$0xf]
      %v836 = vld [vmem:[%s3 + $0xfc] sm:$0xf]
      %v837 = vld [vmem:[%s3 + $0x100] sm:$0xf]
      %v838 = vld [vmem:[%s3 + $0x104] sm:$0xf]
      %v839 = vld [vmem:[%s3 + $0x108] sm:$0xf]
      %v840 = vld [vmem:[%s3 + $0x10c] sm:$0xf]
      %v841 = vld [vmem:[%s3 + $0x110] sm:$0xf]
      %v842 = vld [vmem:[%s3 + $0x114] sm:$0xf]
      %v843 = vld [vmem:[%s3 + $0x118] sm:$0xf]
      %v844 = vld [vmem:[%s3 + $0x11c] sm:$0xf]
      %v845 = vld [vmem:[%s3 + $0x120] sm:$0xf]
      %v846 = vld [vmem:[%s3 + $0x124] sm:$0xf]
      %v847 = vld [vmem:[%s3 + $0x128] sm:$0xf]
      %v848 = vld [vmem:[%s3 + $0x12c] sm:$0xf]
      %v849 = vld [vmem:[%s3 + $0x130] sm:$0xf]
      %v850 = vld [vmem:[%s3 + $0x134] sm:$0xf]
      %v851 = vld [vmem:[%s3 + $0x138] sm:$0xf]
      %v852 = vld [vmem:[%s3 + $0x13c] sm:$0xf]
      %v853 = vld [vmem:[%s3 + $0x140] sm:$0xf]
      %v854 = vld [vmem:[%s3 + $0x144] sm:$0xf]
      %v855 = vld [vmem:[%s3 + $0x148] sm:$0xf]
      %v856 = vld [vmem:[%s3 + $0x14c] sm:$0xf]
      %v857 = vld [vmem:[%s3 + $0x150] sm:$0xf]
      %v858 = vld [vmem:[%s3 + $0x154] sm:$0xf]
      %v859 = vld [vmem:[%s3 + $0x158] sm:$0xf]
      %v860 = vld [vmem:[%s3 + $0x15c] sm:$0xf]
      %v861 = vld [vmem:[%s3 + $0x160] sm:$0xf]
      %v862 = vld [vmem:[%s3 + $0x164] sm:$0xf]
      %v863 = vld [vmem:[%s3 + $0x168] sm:$0xf]
      %v864 = vld [vmem:[%s3 + $0x16c] sm:$0xf]
      %v865 = vld [vmem:[%s3 + $0x170] sm:$0xf]
      %v866 = vld [vmem:[%s3 + $0x174] sm:$0xf]
      %v867 = vld [vmem:[%s3 + $0x178] sm:$0xf]
      %v868 = vld [vmem:[%s3 + $0x17c] sm:$0xf]
      %v869 = vld [vmem:[%s3 + $0x180] sm:$0xf]
      %v870 = vld [vmem:[%s3 + $0x184] sm:$0xf]
      %v871 = vld [vmem:[%s3 + $0x188] sm:$0xf]
      %v872 = vld [vmem:[%s3 + $0x18c] sm:$0xf]
      %v873 = vld [vmem:[%s3 + $0x190] sm:$0xf]
      %v874 = vld [vmem:[%s3 + $0x194] sm:$0xf]
      %v875 = vld [vmem:[%s3 + $0x198] sm:$0xf]
      %v876 = vld [vmem:[%s3 + $0x19c] sm:$0xf]
      %v877 = vld [vmem:[%s3 + $0x1a0] sm:$0xf]
      %v878 = vld [vmem:[%s3 + $0x1a4] sm:$0xf]
      %v879 = vld [vmem:[%s3 + $0x1a8] sm:$0xf]
      %v880 = vld [vmem:[%s3 + $0x1ac] sm:$0xf]
      %v881 = vld [vmem:[%s3 + $0x1b0] sm:$0xf]
      %v882 = vld [vmem:[%s3 + $0x1b4] sm:$0xf]
      %v883 = vld [vmem:[%s3 + $0x1b8] sm:$0xf]
      %v884 = vld [vmem:[%s3 + $0x1bc] sm:$0xf]
      %v885 = vld [vmem:[%s3 + $0x1c0] sm:$0xf]
      %v886 = vld [vmem:[%s3 + $0x1c4] sm:$0xf]
      %v887 = vld [vmem:[%s3 + $0x1c8] sm:$0xf]
      %v888 = vld [vmem:[%s3 + $0x1cc] sm:$0xf]
      %v889 = vld [vmem:[%s3 + $0x1d0] sm:$0xf]
      %v890 = vld [vmem:[%s3 + $0x1d4] sm:$0xf]
      %v891 = vld [vmem:[%s3 + $0x1d8] sm:$0xf]
      %v892 = vld [vmem:[%s3 + $0x1dc] sm:$0xf]
      %v893 = vld [vmem:[%s3 + $0x1e0] sm:$0xf]
      %v894 = vld [vmem:[%s3 + $0x1e4] sm:$0xf]
      %v895 = vld [vmem:[%s3 + $0x1e8] sm:$0xf]
      %v896 = vld [vmem:[%s3 + $0x1ec] sm:$0xf]
      %v897 = vld [vmem:[%s3 + $0x1f0] sm:$0xf]
      %v898 = vld [vmem:[%s3 + $0x1f4] sm:$0xf]
      %v899 = vld [vmem:[%s3 + $0x1f8] sm:$0xf]
      %v900 = vld [vmem:[%s3 + $0x1fc] sm:$0xf]
      %v901 = vld [vmem:[%s3 + $0x200] sm:$0xf]
      %v902 = vld [vmem:[%s3 + $0x204] sm:$0xf]
      %v903 = vld [vmem:[%s3 + $0x208] sm:$0xf]
      %v904 = vld [vmem:[%s3 + $0x20c] sm:$0xf]
      %v905 = vld [vmem:[%s3 + $0x210] sm:$0xf]
      %v906 = vld [vmem:[%s3 + $0x214] sm:$0xf]
      %v907 = vld [vmem:[%s3 + $0x218] sm:$0xf]
      %v908 = vld [vmem:[%s3 + $0x21c] sm:$0xf]
      %v909 = vld [vmem:[%s3 + $0x220] sm:$0xf]
      %v910 = vld [vmem:[%s3 + $0x224] sm:$0xf]
      %v911 = vld [vmem:[%s3 + $0x228] sm:$0xf]
      %v912 = vld [vmem:[%s3 + $0x22c] sm:$0xf]
      %v913 = vld [vmem:[%s3 + $0x230] sm:$0xf]
      %v914 = vld [vmem:[%s3 + $0x234] sm:$0xf]
      %v915 = vld [vmem:[%s3 + $0x238] sm:$0xf]
      %v916 = vld [vmem:[%s3 + $0x23c] sm:$0xf]
      %v917 = vld [vmem:[%s3 + $0x240] sm:$0xf]
      %v918 = vld [vmem:[%s3 + $0x244] sm:$0xf]
      %v919 = vld [vmem:[%s3 + $0x248] sm:$0xf]
      %v920 = vld [vmem:[%s3 + $0x24c] sm:$0xf]
      %v921 = vld [vmem:[%s3 + $0x250] sm:$0xf]
      %v922 = vld [vmem:[%s3 + $0x254] sm:$0xf]
      %v923 = vld [vmem:[%s3 + $0x258] sm:$0xf]
      %v924 = vld [vmem:[%s3 + $0x25c] sm:$0xf]
      %v925 = vld [vmem:[%s3 + $0x260] sm:$0xf]
      %v926 = vld [vmem:[%s3 + $0x264] sm:$0xf]
      %v927 = vld [vmem:[%s3 + $0x268] sm:$0xf]
      %v928 = vld [vmem:[%s3 + $0x26c] sm:$0xf]
      %v929 = vld [vmem:[%s3 + $0x270] sm:$0xf]
      %v930 = vld [vmem:[%s3 + $0x274] sm:$0xf]
      %v931 = vld [vmem:[%s3 + $0x278] sm:$0xf]
      %v932 = vld [vmem:[%s3 + $0x27c] sm:$0xf]
      %v933 = vld [vmem:[%s3 + $0x280] sm:$0xf]
      %v934 = vld [vmem:[%s3 + $0x284] sm:$0xf]
      %v935 = vld [vmem:[%s3 + $0x288] sm:$0xf]
      %v936 = vld [vmem:[%s3 + $0x28c] sm:$0xf]
      %v937 = vld [vmem:[%s3 + $0x290] sm:$0xf]
      %v938 = vld [vmem:[%s3 + $0x294] sm:$0xf]
      %v939 = vld [vmem:[%s3 + $0x298] sm:$0xf]
      %v940 = vld [vmem:[%s3 + $0x29c] sm:$0xf]
      %v941 = vld [vmem:[%s3 + $0x2a0] sm:$0xf]
      %v942 = vld [vmem:[%s3 + $0x2a4] sm:$0xf]
      %v943 = vld [vmem:[%s3 + $0x2a8] sm:$0xf]
      %v944 = vld [vmem:[%s3 + $0x2ac] sm:$0xf]
      %v945 = vld [vmem:[%s3 + $0x2b0] sm:$0xf]
      %v946 = vld [vmem:[%s3 + $0x2b4] sm:$0xf]
      %v947 = vld [vmem:[%s3 + $0x2b8] sm:$0xf]
      %v948 = vld [vmem:[%s3 + $0x2bc] sm:$0xf]
      %v949 = vld [vmem:[%s3 + $0x2c0] sm:$0xf]
      %v950 = vld [vmem:[%s3 + $0x2c4] sm:$0xf]
      %v951 = vld [vmem:[%s3 + $0x2c8] sm:$0xf]
      %v952 = vld [vmem:[%s3 + $0x2cc] sm:$0xf]
      %v953 = vld [vmem:[%s3 + $0x2d0] sm:$0xf]
      %v954 = vld [vmem:[%s3 + $0x2d4] sm:$0xf]
      %v955 = vld [vmem:[%s3 + $0x2d8] sm:$0xf]
      %v956 = vld [vmem:[%s3 + $0x2dc] sm:$0xf]
      %v957 = vld [vmem:[%s3 + $0x2e0] sm:$0xf]
      %v958 = vld [vmem:[%s3 + $0x2e4] sm:$0xf]
      %v959 = vld [vmem:[%s3 + $0x2e8] sm:$0xf]
      %v960 = vld [vmem:[%s3 + $0x2ec] sm:$0xf]
      %v961 = vld [vmem:[%s3 + $0x2f0] sm:$0xf]
      %v962 = vld [vmem:[%s3 + $0x2f4] sm:$0xf]
      %v963 = vld [vmem:[%s3 + $0x2f8] sm:$0xf]
      %v964 = vld [vmem:[%s3 + $0x2fc] sm:$0xf]
      %v965 = vld [vmem:[%s3 + $0x300] sm:$0xf]
      %v966 = vld [vmem:[%s3 + $0x304] sm:$0xf]
      %v967 = vld [vmem:[%s3 + $0x308] sm:$0xf]
      %v968 = vld [vmem:[%s3 + $0x30c] sm:$0xf]
      %v969 = vld [vmem:[%s3 + $0x310] sm:$0xf]
      %v970 = vld [vmem:[%s3 + $0x314] sm:$0xf]
      %v971 = vld [vmem:[%s3 + $0x318] sm:$0xf]
      %v972 = vld [vmem:[%s3 + $0x31c] sm:$0xf]
      %v973 = vld [vmem:[%s4] sm:$0x1]
      %v975 = vperm.slane %v973, 0
      %v1177 = vunpack.c.l.b16 %v773
      %v1178 = vunpack.c.l.b16 %v774
      %v1179 = vunpack.c.l.b16 %v775
      %v1180 = vunpack.c.l.b16 %v776
      %v1181 = vunpack.c.l.b16 %v777
      %v1182 = vunpack.c.l.b16 %v778
      %v1183 = vunpack.c.l.b16 %v779
      %v1184 = vunpack.c.l.b16 %v780
      %v1185 = vunpack.c.l.b16 %v781
      %v1186 = vunpack.c.l.b16 %v782
      %v1187 = vunpack.c.l.b16 %v783
      %v1188 = vunpack.c.l.b16 %v784
      %v1189 = vunpack.c.l.b16 %v785
      %v1190 = vunpack.c.l.b16 %v786
      %v1191 = vunpack.c.l.b16 %v787
      %v1192 = vunpack.c.l.b16 %v788
      %v1193 = vunpack.c.l.b16 %v789
      %v1194 = vunpack.c.l.b16 %v790
      %v1195 = vunpack.c.l.b16 %v791
      %v1196 = vunpack.c.l.b16 %v792
      %v1197 = vunpack.c.l.b16 %v793
      %v1198 = vunpack.c.l.b16 %v794
      %v1199 = vunpack.c.l.b16 %v795
      %v1200 = vunpack.c.l.b16 %v796
      %v1201 = vunpack.c.l.b16 %v797
      %v1202 = vunpack.c.l.b16 %v798
      %v1203 = vunpack.c.l.b16 %v799
      %v1204 = vunpack.c.l.b16 %v800
      %v1205 = vunpack.c.l.b16 %v801
      %v1206 = vunpack.c.l.b16 %v802
      %v1207 = vunpack.c.l.b16 %v803
      %v1208 = vunpack.c.l.b16 %v804
      %v1209 = vunpack.c.l.b16 %v805
      %v1210 = vunpack.c.l.b16 %v806
      %v1211 = vunpack.c.l.b16 %v807
      %v1212 = vunpack.c.l.b16 %v808
      %v1213 = vunpack.c.l.b16 %v809
      %v1214 = vunpack.c.l.b16 %v810
      %v1215 = vunpack.c.l.b16 %v811
      %v1216 = vunpack.c.l.b16 %v812
      %v1217 = vunpack.c.l.b16 %v813
      %v1218 = vunpack.c.l.b16 %v814
      %v1219 = vunpack.c.l.b16 %v815
      %v1220 = vunpack.c.l.b16 %v816
      %v1221 = vunpack.c.l.b16 %v817
      %v1222 = vunpack.c.l.b16 %v818
      %v1223 = vunpack.c.l.b16 %v819
      %v1224 = vunpack.c.l.b16 %v820
      %v1225 = vunpack.c.l.b16 %v821
      %v1226 = vunpack.c.l.b16 %v822
      %v1227 = vunpack.c.l.b16 %v823
      %v1228 = vunpack.c.l.b16 %v824
      %v1229 = vunpack.c.l.b16 %v825
      %v1230 = vunpack.c.l.b16 %v826
      %v1231 = vunpack.c.l.b16 %v827
      %v1232 = vunpack.c.l.b16 %v828
      %v1233 = vunpack.c.l.b16 %v829
      %v1234 = vunpack.c.l.b16 %v830
      %v1235 = vunpack.c.l.b16 %v831
      %v1236 = vunpack.c.l.b16 %v832
      %v1237 = vunpack.c.l.b16 %v833
      %v1238 = vunpack.c.l.b16 %v834
      %v1239 = vunpack.c.l.b16 %v835
      %v1240 = vunpack.c.l.b16 %v836
      %v1241 = vunpack.c.l.b16 %v837
      %v1242 = vunpack.c.l.b16 %v838
      %v1243 = vunpack.c.l.b16 %v839
      %v1244 = vunpack.c.l.b16 %v840
      %v1245 = vunpack.c.l.b16 %v841
      %v1246 = vunpack.c.l.b16 %v842
      %v1247 = vunpack.c.l.b16 %v843
      %v1248 = vunpack.c.l.b16 %v844
      %v1249 = vunpack.c.l.b16 %v845
      %v1250 = vunpack.c.l.b16 %v846
      %v1251 = vunpack.c.l.b16 %v847
      %v1252 = vunpack.c.l.b16 %v848
      %v1253 = vunpack.c.l.b16 %v849
      %v1254 = vunpack.c.l.b16 %v850
      %v1255 = vunpack.c.l.b16 %v851
      %v1256 = vunpack.c.l.b16 %v852
      %v1257 = vunpack.c.l.b16 %v853
      %v1258 = vunpack.c.l.b16 %v854
      %v1259 = vunpack.c.l.b16 %v855
      %v1260 = vunpack.c.l.b16 %v856
      %v1261 = vunpack.c.l.b16 %v857
      %v1262 = vunpack.c.l.b16 %v858
      %v1263 = vunpack.c.l.b16 %v859
      %v1264 = vunpack.c.l.b16 %v860
      %v1265 = vunpack.c.l.b16 %v861
      %v1266 = vunpack.c.l.b16 %v862
      %v1267 = vunpack.c.l.b16 %v863
      %v1268 = vunpack.c.l.b16 %v864
      %v1269 = vunpack.c.l.b16 %v865
      %v1270 = vunpack.c.l.b16 %v866
      %v1271 = vunpack.c.l.b16 %v867
      %v1272 = vunpack.c.l.b16 %v868
      %v1273 = vunpack.c.l.b16 %v869
      %v1274 = vunpack.c.l.b16 %v870
      %v1275 = vunpack.c.l.b16 %v871
      %v1276 = vunpack.c.l.b16 %v872
      %v1277 = vunpack.c.l.b16 %v873
      %v1278 = vunpack.c.l.b16 %v874
      %v1279 = vunpack.c.l.b16 %v875
      %v1280 = vunpack.c.l.b16 %v876
      %v1281 = vunpack.c.l.b16 %v877
      %v1282 = vunpack.c.l.b16 %v878
      %v1283 = vunpack.c.l.b16 %v879
      %v1284 = vunpack.c.l.b16 %v880
      %v1285 = vunpack.c.l.b16 %v881
      %v1286 = vunpack.c.l.b16 %v882
      %v1287 = vunpack.c.l.b16 %v883
      %v1288 = vunpack.c.l.b16 %v884
      %v1289 = vunpack.c.l.b16 %v885
      %v1290 = vunpack.c.l.b16 %v886
      %v1291 = vunpack.c.l.b16 %v887
      %v1292 = vunpack.c.l.b16 %v888
      %v1293 = vunpack.c.l.b16 %v889
      %v1294 = vunpack.c.l.b16 %v890
      %v1295 = vunpack.c.l.b16 %v891
      %v1296 = vunpack.c.l.b16 %v892
      %v1297 = vunpack.c.l.b16 %v893
      %v1298 = vunpack.c.l.b16 %v894
      %v1299 = vunpack.c.l.b16 %v895
      %v1300 = vunpack.c.l.b16 %v896
      %v1301 = vunpack.c.l.b16 %v897
      %v1302 = vunpack.c.l.b16 %v898
      %v1303 = vunpack.c.l.b16 %v899
      %v1304 = vunpack.c.l.b16 %v900
      %v1305 = vunpack.c.l.b16 %v901
      %v1306 = vunpack.c.l.b16 %v902
      %v1307 = vunpack.c.l.b16 %v903
      %v1308 = vunpack.c.l.b16 %v904
      %v1309 = vunpack.c.l.b16 %v905
      %v1310 = vunpack.c.l.b16 %v906
      %v1311 = vunpack.c.l.b16 %v907
      %v1312 = vunpack.c.l.b16 %v908
      %v1313 = vunpack.c.l.b16 %v909
      %v1314 = vunpack.c.l.b16 %v910
      %v1315 = vunpack.c.l.b16 %v911
      %v1316 = vunpack.c.l.b16 %v912
      %v1317 = vunpack.c.l.b16 %v913
      %v1318 = vunpack.c.l.b16 %v914
      %v1319 = vunpack.c.l.b16 %v915
      %v1320 = vunpack.c.l.b16 %v916
      %v1321 = vunpack.c.l.b16 %v917
      %v1322 = vunpack.c.l.b16 %v918
      %v1323 = vunpack.c.l.b16 %v919
      %v1324 = vunpack.c.l.b16 %v920
      %v1325 = vunpack.c.l.b16 %v921
      %v1326 = vunpack.c.l.b16 %v922
      %v1327 = vunpack.c.l.b16 %v923
      %v1328 = vunpack.c.l.b16 %v924
      %v1329 = vunpack.c.l.b16 %v925
      %v1330 = vunpack.c.l.b16 %v926
      %v1331 = vunpack.c.l.b16 %v927
      %v1332 = vunpack.c.l.b16 %v928
      %v1333 = vunpack.c.l.b16 %v929
      %v1334 = vunpack.c.l.b16 %v930
      %v1335 = vunpack.c.l.b16 %v931
      %v1336 = vunpack.c.l.b16 %v932
      %v1337 = vunpack.c.l.b16 %v933
      %v1338 = vunpack.c.l.b16 %v934
      %v1339 = vunpack.c.l.b16 %v935
      %v1340 = vunpack.c.l.b16 %v936
      %v1341 = vunpack.c.l.b16 %v937
      %v1342 = vunpack.c.l.b16 %v938
      %v1343 = vunpack.c.l.b16 %v939
      %v1344 = vunpack.c.l.b16 %v940
      %v1345 = vunpack.c.l.b16 %v941
      %v1346 = vunpack.c.l.b16 %v942
      %v1347 = vunpack.c.l.b16 %v943
      %v1348 = vunpack.c.l.b16 %v944
      %v1349 = vunpack.c.l.b16 %v945
      %v1350 = vunpack.c.l.b16 %v946
      %v1351 = vunpack.c.l.b16 %v947
      %v1352 = vunpack.c.l.b16 %v948
      %v1353 = vunpack.c.l.b16 %v949
      %v1354 = vunpack.c.l.b16 %v950
      %v1355 = vunpack.c.l.b16 %v951
      %v1356 = vunpack.c.l.b16 %v952
      %v1357 = vunpack.c.l.b16 %v953
      %v1358 = vunpack.c.l.b16 %v954
      %v1359 = vunpack.c.l.b16 %v955
      %v1360 = vunpack.c.l.b16 %v956
      %v1361 = vunpack.c.l.b16 %v957
      %v1362 = vunpack.c.l.b16 %v958
      %v1363 = vunpack.c.l.b16 %v959
      %v1364 = vunpack.c.l.b16 %v960
      %v1365 = vunpack.c.l.b16 %v961
      %v1366 = vunpack.c.l.b16 %v962
      %v1367 = vunpack.c.l.b16 %v963
      %v1368 = vunpack.c.l.b16 %v964
      %v1369 = vunpack.c.l.b16 %v965
      %v1370 = vunpack.c.l.b16 %v966
      %v1371 = vunpack.c.l.b16 %v967
      %v1372 = vunpack.c.l.b16 %v968
      %v1373 = vunpack.c.l.b16 %v969
      %v1374 = vunpack.c.l.b16 %v970
      %v1375 = vunpack.c.l.b16 %v971
      %v1376 = vunpack.c.l.b16 %v972
      %v1377 = vpack.c.b16 %v1178, %v1177
      %v1378 = vpack.c.b16 %v1180, %v1179
      %v1379 = vpack.c.b16 %v1182, %v1181
      %v1380 = vpack.c.b16 %v1184, %v1183
      %v1381 = vpack.c.b16 %v1186, %v1185
      %v1382 = vpack.c.b16 %v1188, %v1187
      %v1383 = vpack.c.b16 %v1190, %v1189
      %v1384 = vpack.c.b16 %v1192, %v1191
      %v1385 = vpack.c.b16 %v1194, %v1193
      %v1386 = vpack.c.b16 %v1196, %v1195
      %v1387 = vpack.c.b16 %v1198, %v1197
      %v1388 = vpack.c.b16 %v1200, %v1199
      %v1389 = vpack.c.b16 %v1202, %v1201
      %v1390 = vpack.c.b16 %v1204, %v1203
      %v1391 = vpack.c.b16 %v1206, %v1205
      %v1392 = vpack.c.b16 %v1208, %v1207
      %v1393 = vpack.c.b16 %v1210, %v1209
      %v1394 = vpack.c.b16 %v1212, %v1211
      %v1395 = vpack.c.b16 %v1214, %v1213
      %v1396 = vpack.c.b16 %v1216, %v1215
      %v1397 = vpack.c.b16 %v1218, %v1217
      %v1398 = vpack.c.b16 %v1220, %v1219
      %v1399 = vpack.c.b16 %v1222, %v1221
      %v1400 = vpack.c.b16 %v1224, %v1223
      %v1401 = vpack.c.b16 %v1226, %v1225
      %v1402 = vpack.c.b16 %v1228, %v1227
      %v1403 = vpack.c.b16 %v1230, %v1229
      %v1404 = vpack.c.b16 %v1232, %v1231
      %v1405 = vpack.c.b16 %v1234, %v1233
      %v1406 = vpack.c.b16 %v1236, %v1235
      %v1407 = vpack.c.b16 %v1238, %v1237
      %v1408 = vpack.c.b16 %v1240, %v1239
      %v1409 = vpack.c.b16 %v1242, %v1241
      %v1410 = vpack.c.b16 %v1244, %v1243
      %v1411 = vpack.c.b16 %v1246, %v1245
      %v1412 = vpack.c.b16 %v1248, %v1247
      %v1413 = vpack.c.b16 %v1250, %v1249
      %v1414 = vpack.c.b16 %v1252, %v1251
      %v1415 = vpack.c.b16 %v1254, %v1253
      %v1416 = vpack.c.b16 %v1256, %v1255
      %v1417 = vpack.c.b16 %v1258, %v1257
      %v1418 = vpack.c.b16 %v1260, %v1259
      %v1419 = vpack.c.b16 %v1262, %v1261
      %v1420 = vpack.c.b16 %v1264, %v1263
      %v1421 = vpack.c.b16 %v1266, %v1265
      %v1422 = vpack.c.b16 %v1268, %v1267
      %v1423 = vpack.c.b16 %v1270, %v1269
      %v1424 = vpack.c.b16 %v1272, %v1271
      %v1425 = vpack.c.b16 %v1274, %v1273
      %v1426 = vpack.c.b16 %v1276, %v1275
      %v1427 = vpack.c.b16 %v1278, %v1277
      %v1428 = vpack.c.b16 %v1280, %v1279
      %v1429 = vpack.c.b16 %v1282, %v1281
      %v1430 = vpack.c.b16 %v1284, %v1283
      %v1431 = vpack.c.b16 %v1286, %v1285
      %v1432 = vpack.c.b16 %v1288, %v1287
      %v1433 = vpack.c.b16 %v1290, %v1289
      %v1434 = vpack.c.b16 %v1292, %v1291
      %v1435 = vpack.c.b16 %v1294, %v1293
      %v1436 = vpack.c.b16 %v1296, %v1295
      %v1437 = vpack.c.b16 %v1298, %v1297
      %v1438 = vpack.c.b16 %v1300, %v1299
      %v1439 = vpack.c.b16 %v1302, %v1301
      %v1440 = vpack.c.b16 %v1304, %v1303
      %v1441 = vpack.c.b16 %v1306, %v1305
      %v1442 = vpack.c.b16 %v1308, %v1307
      %v1443 = vpack.c.b16 %v1310, %v1309
      %v1444 = vpack.c.b16 %v1312, %v1311
      %v1445 = vpack.c.b16 %v1314, %v1313
      %v1446 = vpack.c.b16 %v1316, %v1315
      %v1447 = vpack.c.b16 %v1318, %v1317
      %v1448 = vpack.c.b16 %v1320, %v1319
      %v1449 = vpack.c.b16 %v1322, %v1321
      %v1450 = vpack.c.b16 %v1324, %v1323
      %v1451 = vpack.c.b16 %v1326, %v1325
      %v1452 = vpack.c.b16 %v1328, %v1327
      %v1453 = vpack.c.b16 %v1330, %v1329
      %v1454 = vpack.c.b16 %v1332, %v1331
      %v1455 = vpack.c.b16 %v1334, %v1333
      %v1456 = vpack.c.b16 %v1336, %v1335
      %v1457 = vpack.c.b16 %v1338, %v1337
      %v1458 = vpack.c.b16 %v1340, %v1339
      %v1459 = vpack.c.b16 %v1342, %v1341
      %v1460 = vpack.c.b16 %v1344, %v1343
      %v1461 = vpack.c.b16 %v1346, %v1345
      %v1462 = vpack.c.b16 %v1348, %v1347
      %v1463 = vpack.c.b16 %v1350, %v1349
      %v1464 = vpack.c.b16 %v1352, %v1351
      %v1465 = vpack.c.b16 %v1354, %v1353
      %v1466 = vpack.c.b16 %v1356, %v1355
      %v1467 = vpack.c.b16 %v1358, %v1357
      %v1468 = vpack.c.b16 %v1360, %v1359
      %v1469 = vpack.c.b16 %v1362, %v1361
      %v1470 = vpack.c.b16 %v1364, %v1363
      %v1471 = vpack.c.b16 %v1366, %v1365
      %v1472 = vpack.c.b16 %v1368, %v1367
      %v1473 = vpack.c.b16 %v1370, %v1369
      %v1474 = vpack.c.b16 %v1372, %v1371
      %v1475 = vpack.c.b16 %v1374, %v1373
      %v1476 = vpack.c.b16 %v1376, %v1375
      %vm1577 = vcmask 523264
      %v1579 = vsel %vm1577, %v772, 0
      %1581 = vmatpush.bf16.msra.mxu0 %v1384
      %1582 = vmatpush.bf16.msra.mxu0 %v1383
      %1583 = vmatpush.bf16.msra.mxu0 %v1382
      %1584 = vmatpush.bf16.msra.mxu0 %v1381
      %1585 = vmatpush.bf16.msra.mxu0 %v1380
      %1586 = vmatpush.bf16.msra.mxu0 %v1379
      %1587 = vmatpush.bf16.msra.mxu0 %v1378
      %1588 = vmatpush.bf16.msra.mxu0 %v1377
      %1589 = vmatmul.bf16.gmra.mxu0 %v760
      %v1590 = vpop.f32.mrf.mxu0
      %v1591 = vadd.f32 %v975, %v1590
      %v1592 = vpop.f32.mrf.mxu0
      %1593 = vdwg.mxu0
      %1594 = vmatpush.bf16.msra.mxu0 %v1392
      %1595 = vmatpush.bf16.msra.mxu0 %v1391
      %1596 = vmatpush.bf16.msra.mxu0 %v1390
      %1597 = vmatpush.bf16.msra.mxu0 %v1389
      %1598 = vmatpush.bf16.msra.mxu0 %v1388
      %1599 = vmatpush.bf16.msra.mxu0 %v1387
      %1600 = vmatpush.bf16.msra.mxu0 %v1386
      %1601 = vmatpush.bf16.msra.mxu0 %v1385
      %1602 = vmatmul.bf16.gmra.mxu0 %v761
      %v1603 = vpop.f32.mrf.mxu0
      %v1604 = vadd.f32 %v1591, %v1603
      %v1605 = vpop.f32.mrf.mxu0
      %1606 = vdwg.mxu0
      %1607 = vmatpush.bf16.msra.mxu0 %v1400
      %1608 = vmatpush.bf16.msra.mxu0 %v1399
      %1609 = vmatpush.bf16.msra.mxu0 %v1398
      %1610 = vmatpush.bf16.msra.mxu0 %v1397
      %1611 = vmatpush.bf16.msra.mxu0 %v1396
      %1612 = vmatpush.bf16.msra.mxu0 %v1395
      %1613 = vmatpush.bf16.msra.mxu0 %v1394
      %1614 = vmatpush.bf16.msra.mxu0 %v1393
      %1615 = vmatmul.bf16.gmra.mxu0 %v762
      %v1616 = vpop.f32.mrf.mxu0
      %v1617 = vadd.f32 %v1604, %v1616
      %v1618 = vpop.f32.mrf.mxu0
      %1619 = vdwg.mxu0
      %1620 = vmatpush.bf16.msra.mxu0 %v1408
      %1621 = vmatpush.bf16.msra.mxu0 %v1407
      %1622 = vmatpush.bf16.msra.mxu0 %v1406
      %1623 = vmatpush.bf16.msra.mxu0 %v1405
      %1624 = vmatpush.bf16.msra.mxu0 %v1404
      %1625 = vmatpush.bf16.msra.mxu0 %v1403
      %1626 = vmatpush.bf16.msra.mxu0 %v1402
      %1627 = vmatpush.bf16.msra.mxu0 %v1401
      %1628 = vmatmul.bf16.gmra.mxu0 %v763
      %v1629 = vpop.f32.mrf.mxu0
      %v1630 = vadd.f32 %v1617, %v1629
      %v1631 = vpop.f32.mrf.mxu0
      %1632 = vdwg.mxu0
      %1633 = vmatpush.bf16.msra.mxu0 %v1416
      %1634 = vmatpush.bf16.msra.mxu0 %v1415
      %1635 = vmatpush.bf16.msra.mxu0 %v1414
      %1636 = vmatpush.bf16.msra.mxu0 %v1413
      %1637 = vmatpush.bf16.msra.mxu0 %v1412
      %1638 = vmatpush.bf16.msra.mxu0 %v1411
      %1639 = vmatpush.bf16.msra.mxu0 %v1410
      %1640 = vmatpush.bf16.msra.mxu0 %v1409
      %1641 = vmatmul.bf16.gmra.mxu0 %v764
      %v1642 = vpop.f32.mrf.mxu0
      %v1643 = vadd.f32 %v1630, %v1642
      %v1644 = vpop.f32.mrf.mxu0
      %1645 = vdwg.mxu0
      %1646 = vmatpush.bf16.msra.mxu0 %v1424
      %1647 = vmatpush.bf16.msra.mxu0 %v1423
      %1648 = vmatpush.bf16.msra.mxu0 %v1422
      %1649 = vmatpush.bf16.msra.mxu0 %v1421
      %1650 = vmatpush.bf16.msra.mxu0 %v1420
      %1651 = vmatpush.bf16.msra.mxu0 %v1419
      %1652 = vmatpush.bf16.msra.mxu0 %v1418
      %1653 = vmatpush.bf16.msra.mxu0 %v1417
      %1654 = vmatmul.bf16.gmra.mxu0 %v765
      %v1655 = vpop.f32.mrf.mxu0
      %v1656 = vadd.f32 %v1643, %v1655
      %v1657 = vpop.f32.mrf.mxu0
      %1658 = vdwg.mxu0
      %1659 = vmatpush.bf16.msra.mxu0 %v1432
      %1660 = vmatpush.bf16.msra.mxu0 %v1431
      %1661 = vmatpush.bf16.msra.mxu0 %v1430
      %1662 = vmatpush.bf16.msra.mxu0 %v1429
      %1663 = vmatpush.bf16.msra.mxu0 %v1428
      %1664 = vmatpush.bf16.msra.mxu0 %v1427
      %1665 = vmatpush.bf16.msra.mxu0 %v1426
      %1666 = vmatpush.bf16.msra.mxu0 %v1425
      %1667 = vmatmul.bf16.gmra.mxu0 %v766
      %v1668 = vpop.f32.mrf.mxu0
      %v1669 = vadd.f32 %v1656, %v1668
      %v1670 = vpop.f32.mrf.mxu0
      %1671 = vdwg.mxu0
      %1672 = vmatpush.bf16.msra.mxu0 %v1440
      %1673 = vmatpush.bf16.msra.mxu0 %v1439
      %1674 = vmatpush.bf16.msra.mxu0 %v1438
      %1675 = vmatpush.bf16.msra.mxu0 %v1437
      %1676 = vmatpush.bf16.msra.mxu0 %v1436
      %1677 = vmatpush.bf16.msra.mxu0 %v1435
      %1678 = vmatpush.bf16.msra.mxu0 %v1434
      %1679 = vmatpush.bf16.msra.mxu0 %v1433
      %1680 = vmatmul.bf16.gmra.mxu0 %v767
      %v1681 = vpop.f32.mrf.mxu0
      %v1682 = vadd.f32 %v1669, %v1681
      %v1683 = vpop.f32.mrf.mxu0
      %1684 = vdwg.mxu0
      %1685 = vmatpush.bf16.msra.mxu0 %v1448
      %1686 = vmatpush.bf16.msra.mxu0 %v1447
      %1687 = vmatpush.bf16.msra.mxu0 %v1446
      %1688 = vmatpush.bf16.msra.mxu0 %v1445
      %1689 = vmatpush.bf16.msra.mxu0 %v1444
      %1690 = vmatpush.bf16.msra.mxu0 %v1443
      %1691 = vmatpush.bf16.msra.mxu0 %v1442
      %1692 = vmatpush.bf16.msra.mxu0 %v1441
      %1693 = vmatmul.bf16.gmra.mxu0 %v768
      %v1694 = vpop.f32.mrf.mxu0
      %v1695 = vadd.f32 %v1682, %v1694
      %v1696 = vpop.f32.mrf.mxu0
      %1697 = vdwg.mxu0
      %1698 = vmatpush.bf16.msra.mxu0 %v1456
      %1699 = vmatpush.bf16.msra.mxu0 %v1455
      %1700 = vmatpush.bf16.msra.mxu0 %v1454
      %1701 = vmatpush.bf16.msra.mxu0 %v1453
      %1702 = vmatpush.bf16.msra.mxu0 %v1452
      %1703 = vmatpush.bf16.msra.mxu0 %v1451
      %1704 = vmatpush.bf16.msra.mxu0 %v1450
      %1705 = vmatpush.bf16.msra.mxu0 %v1449
      %1706 = vmatmul.bf16.gmra.mxu0 %v769
      %v1707 = vpop.f32.mrf.mxu0
      %v1708 = vadd.f32 %v1695, %v1707
      %v1709 = vpop.f32.mrf.mxu0
      %1710 = vdwg.mxu0
      %1711 = vmatpush.bf16.msra.mxu0 %v1464
      %1712 = vmatpush.bf16.msra.mxu0 %v1463
      %1713 = vmatpush.bf16.msra.mxu0 %v1462
      %1714 = vmatpush.bf16.msra.mxu0 %v1461
      %1715 = vmatpush.bf16.msra.mxu0 %v1460
      %1716 = vmatpush.bf16.msra.mxu0 %v1459
      %1717 = vmatpush.bf16.msra.mxu0 %v1458
      %1718 = vmatpush.bf16.msra.mxu0 %v1457
      %1719 = vmatmul.bf16.gmra.mxu0 %v770
      %v1720 = vpop.f32.mrf.mxu0
      %v1721 = vadd.f32 %v1708, %v1720
      %v1722 = vpop.f32.mrf.mxu0
      %1723 = vdwg.mxu0
      %1724 = vmatpush.bf16.msra.mxu0 %v1472
      %1725 = vmatpush.bf16.msra.mxu0 %v1471
      %1726 = vmatpush.bf16.msra.mxu0 %v1470
      %1727 = vmatpush.bf16.msra.mxu0 %v1469
      %1728 = vmatpush.bf16.msra.mxu0 %v1468
      %1729 = vmatpush.bf16.msra.mxu0 %v1467
      %1730 = vmatpush.bf16.msra.mxu0 %v1466
      %1731 = vmatpush.bf16.msra.mxu0 %v1465
      %1732 = vmatmul.bf16.gmra.mxu0 %v771
      %v1733 = vpop.f32.mrf.mxu0
      %v1734 = vadd.f32 %v1721, %v1733
      %v1735 = vpop.f32.mrf.mxu0
      %1736 = vdwg.mxu0
      %1737 = vmatpush.bf16.msra.mxu0 0
      %1738 = vmatpush.bf16.msra.mxu0 0
      %1739 = vmatpush.bf16.msra.mxu0 0
      %1740 = vmatpush.bf16.msra.mxu0 0
      %1741 = vmatpush.bf16.msra.mxu0 %v1476
      %1742 = vmatpush.bf16.msra.mxu0 %v1475
      %1743 = vmatpush.bf16.msra.mxu0 %v1474
      %1744 = vmatpush.bf16.msra.mxu0 %v1473
      %1745 = vmatmul.bf16.gmra.mxu0 %v1579
      %v1746 = vpop.f32.mrf.mxu0
      %v1747 = vadd.f32 %v1734, %v1746
      %v1748 = vpop.f32.mrf.mxu0
      %1749 = vdwg.mxu0
      %v1750 = vmax.f32 %v1747, 0.0
      %v1751 = vpack.c.bf16 %v1750, %v1750
      %vm1752 = vcmask 257024
      %1753 = vst.msk [vmem:[#allocation2] sm:$0xf] %vm1752, %v1751
    $region29: #{tpu_custom_call.1} parent=1 // pred_fallthru
      _
    %v1754 = vld [vmem:[#allocation2] sm:$0xf]
    %v1755 = vld [vmem:[%s5] sm:$0xf]
    %v1756 = vld [vmem:[%s5 + $0x4] sm:$0xf]
    %v1757 = vld [vmem:[%s5 + $0x8] sm:$0xf]
    %v1758 = vld [vmem:[%s5 + $0xc] sm:$0xf]
    %v1763 = vunpack.c.l.b16 %v1755
    %v1764 = vunpack.c.l.b16 %v1756
    %v1765 = vunpack.c.l.b16 %v1757
    %v1766 = vunpack.c.l.b16 %v1758
    %v1767 = vpack.c.b16 %v1764, %v1763
    %v1768 = vpack.c.b16 %v1766, %v1765
    %vm1771 = vcmask 261120
    %v1773 = vsel %vm1771, %v1754, 0
    %1775 = vmatpush.bf16.msra.mxu0 0
    %1776 = vmatpush.bf16.msra.mxu0 0
    %1777 = vmatpush.bf16.msra.mxu0 0
    %1778 = vmatpush.bf16.msra.mxu0 0
    %1779 = vmatpush.bf16.msra.mxu0 0
    %1780 = vmatpush.bf16.msra.mxu0 0
    %1781 = vmatpush.bf16.msra.mxu0 %v1768
    %1782 = vmatpush.bf16.msra.mxu0 %v1767
    %1783 = vmatmul.bf16.gmra.mxu0 %v1773
    %v1784 = vpop.f32.mrf.mxu0
    %v1785 = vadd.f32 0.0, %v1784
    %v1786 = vpop.f32.mrf.mxu0
    %1787 = vdwg.mxu0
    %1788 = vst [vmem:[#allocation3] sm:$0xff] %v1785
    // Predicated region
    $region30: #{tpu_custom_call.1} parent=1 // pred_check
      _
    $region31: #{tpu_custom_call.1} parent=1 // pred_check_branch
      %1790 = sbr.rel (0) target = $region33
    $region32: #{tpu_custom_call.1} parent=1 // pred_region
      %1792 = vsyncadd [#allocation4], 0
      %s1794 = sshll.u32 [#allocation3], 4
      %s1795 = int_to_ptr.vmem [resolvable:$true] %s1794
      %s1796 = sshll.u32 %s6, 4
      %s1797 = int_to_ptr.hbm [resolvable:$true] %s1796
      %1799 = dma.vmem_to_hbm [thread:$0]  %s1795, 128, %s1797, [#allocation4]
    $region33: #{tpu_custom_call.1} parent=1 // pred_fallthru
      _
    // Predicated region
    $region34: #{tpu_custom_call.1} parent=1 // pred_check
      _
    $region35: #{tpu_custom_call.1} parent=1 // pred_check_branch
      %1801 = sbr.rel (0) target = $region37
    $region36: #{tpu_custom_call.1} parent=1 // pred_region
      %1803 = dma.done [#allocation4], 128
    $region37: #{tpu_custom_call.1} parent=1 // pred_fallthru
      _
    %1804 = vsyncpa [#allocation4], 1

</llo_original>
